<compile_context>
chip_gen: v5e
topology: v5e:2x2
jax: 0.10.0
libtpu: 0.0.40
codegen_flags: <defaults>
</compile_context>

<pallas_src>
import jax
import jax.numpy as jnp
from jax.experimental import pallas as pl
from jax.experimental.pallas import tpu as pltpu

D_MODEL = 32
N_HEADS = 4
HEAD_DIM = D_MODEL // N_HEADS
D_FFN = 64
EPS = 1e-5   # nn.LayerNorm default eps


# ---------------------------------------------------------------------------
# Fused kernel: whole encoder layer in one invocation (everything in VMEM)
# ---------------------------------------------------------------------------
def _fused_layer_kernel(
    query_ref, ref_query_ref, qpos_ref, rpos_ref,
    sa_wq, sa_wk, sa_wv, sa_wo, sa_bq, sa_bk, sa_bv, sa_bo,
    n2_g, n2_b,
    ca_wq, ca_wk, ca_wv, ca_wo, ca_bq, ca_bk, ca_bv, ca_bo,
    n1_g, n1_b,
    w1_ref, b1_ref, w2_ref, b2_ref, n3_g, n3_b,
    o_ref,
):
    B, Lq, D = query_ref.shape
    _, Lk, _ = ref_query_ref.shape
    scale = 1.0 / (HEAD_DIM ** 0.5)

    # Flat (B*L, D) slabs (major-dim merge only; lane dim untouched).
    query = query_ref[...].reshape(B * Lq, D)
    ref_query = ref_query_ref[...].reshape(B * Lk, D)
    qpos = qpos_ref[...].reshape(B * Lq, D)      # hoisted: reused by both attns
    rpos = rpos_ref[...].reshape(B * Lk, D)

    def mha(q_in, k_in, v_in, lq, lk, wq, wk, wv, wo, bq, bk, bv, bo):
        # Projections as single (B*L, D) x (D, D) matmuls across the whole batch.
        q = jnp.dot(q_in, wq[...], preferred_element_type=jnp.float32) + bq[...]
        k = jnp.dot(k_in, wk[...], preferred_element_type=jnp.float32) + bk[...]
        v = jnp.dot(v_in, wv[...], preferred_element_type=jnp.float32) + bv[...]
        q3 = (q * scale).reshape(B, lq, D)
        k3 = k.reshape(B, lk, D)
        v3 = v.reshape(B, lk, D)
        wo_all = wo[...]
        out = jnp.zeros((B * lq, D), jnp.float32)
        # Static head loop (4 iters, unrolled at trace time). Batch is handled
        # by the batched contraction, so there is no per-batch grid/loop, no
        # explicit transpose (contract last dims directly), and no concat:
        # concat(heads) @ Wo == sum_h head_h @ Wo[rows_h].
        for h in range(N_HEADS):
            sl = slice(h * HEAD_DIM, (h + 1) * HEAD_DIM)
            s = jnp.einsum('bqd,bkd->bqk', q3[:, :, sl], k3[:, :, sl],
                           preferred_element_type=jnp.float32)
            s = s - jnp.max(s, axis=-1, keepdims=True)
            p = jnp.exp(s)
            p = p * pl.reciprocal(jnp.sum(p, axis=-1, keepdims=True), approx=True)
            oh = jnp.einsum('bqk,bkd->bqd', p, v3[:, :, sl],
                            preferred_element_type=jnp.float32)
            out = out + jnp.dot(oh.reshape(B * lq, HEAD_DIM), wo_all[sl, :],
                                preferred_element_type=jnp.float32)
        return out + bo[...]

    def layer_norm(x, g, b):
        mean = jnp.mean(x, axis=-1, keepdims=True)
        c = x - mean
        var = jnp.mean(c * c, axis=-1, keepdims=True)
        return c * jax.lax.rsqrt(var + EPS) * g[...] + b[...]

    # --- self attention (q = k = query+pos, v = query) -> add & norm2 ---
    q_sa = query + qpos
    tgt2 = mha(q_sa, q_sa, query, Lq, Lq,
               sa_wq, sa_wk, sa_wv, sa_wo, sa_bq, sa_bk, sa_bv, sa_bo)
    tgt = layer_norm(query + tgt2, n2_g, n2_b)

    # --- cross attention (q = tgt+pos, k = ref+refpos, v = ref) -> add & norm1 ---
    tgt2 = mha(tgt + qpos, ref_query + rpos, ref_query, Lq, Lk,
               ca_wq, ca_wk, ca_wv, ca_wo, ca_bq, ca_bk, ca_bv, ca_bo)
    tgt = layer_norm(tgt + tgt2, n1_g, n1_b)

    # --- FFN (linear1 -> relu -> linear2) -> add & norm3 ---
    h1 = jnp.maximum(
        jnp.dot(tgt, w1_ref[...], preferred_element_type=jnp.float32) + b1_ref[...],
        0.0)
    y = jnp.dot(h1, w2_ref[...], preferred_element_type=jnp.float32) + b2_ref[...]
    tgt = layer_norm(tgt + y, n3_g, n3_b)

    # Single lane-dense write of all outputs at the end.
    o_ref[...] = tgt.reshape(B, Lq, D).astype(o_ref.dtype)


# ---------------------------------------------------------------------------
# Wrapper: one pallas_call, no grid, full arrays resident in VMEM (<100 KB)
# ---------------------------------------------------------------------------
def temporal_query_encoder_layer(query, ref_query, params,
                                 query_pos=None, ref_query_pos=None):
    if query_pos is None:
        query_pos = jnp.zeros_like(query)
    if ref_query_pos is None:
        ref_query_pos = jnp.zeros_like(ref_query)
    B, Lq, D = query.shape
    sa, ca = params["self_attn"], params["cross_attn"]
    n1, n2, fp = params["norm1"], params["norm2"], params["ffn"]
    args = (
        query, ref_query, query_pos, ref_query_pos,
        sa["wq"], sa["wk"], sa["wv"], sa["wo"],
        sa["bq"], sa["bk"], sa["bv"], sa["bo"],
        n2["gamma"], n2["beta"],
        ca["wq"], ca["wk"], ca["wv"], ca["wo"],
        ca["bq"], ca["bk"], ca["bv"], ca["bo"],
        n1["gamma"], n1["beta"],
        fp["w1"], fp["b1"], fp["w2"], fp["b2"], fp["gamma"], fp["beta"],
    )
    return pl.pallas_call(
        _fused_layer_kernel,
        out_shape=jax.ShapeDtypeStruct((B, Lq, D), query.dtype),
    )(*args)


# ---------------------------------------------------------------------------
# Pure-JAX reference (same math) for a correctness sanity check
# ---------------------------------------------------------------------------
def _ref_mha(q_in, k_in, v_in, p):
    q = q_in @ p["wq"] + p["bq"]
    k = k_in @ p["wk"] + p["bk"]
    v = v_in @ p["wv"] + p["bv"]
    B, Lq, D = q.shape
    Lk = k.shape[1]
    qh = q.reshape(B, Lq, N_HEADS, HEAD_DIM).transpose(0, 2, 1, 3)
    kh = k.reshape(B, Lk, N_HEADS, HEAD_DIM).transpose(0, 2, 1, 3)
    vh = v.reshape(B, Lk, N_HEADS, HEAD_DIM).transpose(0, 2, 1, 3)
    s = jnp.einsum("bhqd,bhkd->bhqk", qh, kh) / (HEAD_DIM ** 0.5)
    p_ = jax.nn.softmax(s, axis=-1)
    o = jnp.einsum("bhqk,bhkd->bhqd", p_, vh).transpose(0, 2, 1, 3).reshape(B, Lq, D)
    return o @ p["wo"] + p["bo"]


def _ref_ln(x, p):
    mean = jnp.mean(x, axis=-1, keepdims=True)
    var = jnp.mean((x - mean) ** 2, axis=-1, keepdims=True)
    return (x - mean) * jax.lax.rsqrt(var + EPS) * p["gamma"] + p["beta"]


def _ref_forward(query, ref_query, params, query_pos, ref_query_pos):
    q = query + query_pos
    tgt = _ref_ln(query + _ref_mha(q, q, query, params["self_attn"]), params["norm2"])
    tgt2 = _ref_mha(tgt + query_pos, ref_query + ref_query_pos, ref_query,
                    params["cross_attn"])
    tgt = _ref_ln(tgt + tgt2, params["norm1"])
    h = jnp.maximum(tgt @ params["ffn"]["w1"] + params["ffn"]["b1"], 0.0)
    y = h @ params["ffn"]["w2"] + params["ffn"]["b2"]
    return _ref_ln(tgt + y, params["ffn"])


# ---------------------------------------------------------------------------
# Deterministic parameter construction
# ---------------------------------------------------------------------------
def _make_attn_params(key):
    ks = jax.random.split(key, 8)
    f = lambda k, shape: (0.05 * jax.random.normal(k, shape)).astype(jnp.float32)
    return {
        "wq": f(ks[0], (D_MODEL, D_MODEL)), "wk": f(ks[1], (D_MODEL, D_MODEL)),
        "wv": f(ks[2], (D_MODEL, D_MODEL)), "wo": f(ks[3], (D_MODEL, D_MODEL)),
        "bq": f(ks[4], (1, D_MODEL)), "bk": f(ks[5], (1, D_MODEL)),
        "bv": f(ks[6], (1, D_MODEL)), "bo": f(ks[7], (1, D_MODEL)),
    }


def make_params(key):
    k_sa, k_ca, k_ffn = jax.random.split(key, 3)
    kf = jax.random.split(k_ffn, 4)
    f = lambda k, shape: (0.05 * jax.random.normal(k, shape)).astype(jnp.float32)
    return {
        "self_attn": _make_attn_params(k_sa),
        "cross_attn": _make_attn_params(k_ca),
        "norm1": {"gamma": jnp.ones((1, D_MODEL), jnp.float32),
                  "beta": jnp.zeros((1, D_MODEL), jnp.float32)},
        "norm2": {"gamma": jnp.ones((1, D_MODEL), jnp.float32),
                  "beta": jnp.zeros((1, D_MODEL), jnp.float32)},
        "ffn": {"w1": f(kf[0], (D_MODEL, D_FFN)), "b1": f(kf[1], (1, D_FFN)),
                "w2": f(kf[2], (D_FFN, D_MODEL)), "b2": f(kf[3], (1, D_MODEL)),
                "gamma": jnp.ones((1, D_MODEL), jnp.float32),
                "beta": jnp.zeros((1, D_MODEL), jnp.float32)},
    }


if __name__ == "__main__":
    B, LQ, LK = 2, 8, 8
    key = jax.random.PRNGKey(0)
    k1, k2, k3, k4, kp = jax.random.split(key, 5)
    query = jax.random.normal(k1, (B, LQ, D_MODEL), jnp.float32)
    ref_query = jax.random.normal(k2, (B, LK, D_MODEL), jnp.float32)
    query_pos = jax.random.normal(k3, (B, LQ, D_MODEL), jnp.float32)
    ref_query_pos = jax.random.normal(k4, (B, LK, D_MODEL), jnp.float32)
    params = make_params(kp)

    out = temporal_query_encoder_layer(query, ref_query, params,
                                       query_pos, ref_query_pos)
    out = jax.block_until_ready(out)

    ref = _ref_forward(query, ref_query, params, query_pos, ref_query_pos)
    assert out.shape == (B, LQ, D_MODEL)
    # tolerance allows for pl.reciprocal(approx=True) in the softmax denom
    assert jnp.allclose(out, ref, rtol=2e-3, atol=2e-3), \
        f"max abs diff {jnp.max(jnp.abs(out - ref))}"
    print("KERNEL_OK")
</pallas_src>

<mosaic_0001>
module attributes {stable_mosaic.version = 11 : i64} {
  func.func @_fused_layer_kernel(%arg0: memref<2x8x32xf32, #tpu.memory_space<vmem>>, %arg1: memref<2x8x32xf32, #tpu.memory_space<vmem>>, %arg2: memref<2x8x32xf32, #tpu.memory_space<vmem>>, %arg3: memref<2x8x32xf32, #tpu.memory_space<vmem>>, %arg4: memref<32x32xf32, #tpu.memory_space<vmem>>, %arg5: memref<32x32xf32, #tpu.memory_space<vmem>>, %arg6: memref<32x32xf32, #tpu.memory_space<vmem>>, %arg7: memref<32x32xf32, #tpu.memory_space<vmem>>, %arg8: memref<1x32xf32, #tpu.memory_space<vmem>>, %arg9: memref<1x32xf32, #tpu.memory_space<vmem>>, %arg10: memref<1x32xf32, #tpu.memory_space<vmem>>, %arg11: memref<1x32xf32, #tpu.memory_space<vmem>>, %arg12: memref<1x32xf32, #tpu.memory_space<vmem>>, %arg13: memref<1x32xf32, #tpu.memory_space<vmem>>, %arg14: memref<32x32xf32, #tpu.memory_space<vmem>>, %arg15: memref<32x32xf32, #tpu.memory_space<vmem>>, %arg16: memref<32x32xf32, #tpu.memory_space<vmem>>, %arg17: memref<32x32xf32, #tpu.memory_space<vmem>>, %arg18: memref<1x32xf32, #tpu.memory_space<vmem>>, %arg19: memref<1x32xf32, #tpu.memory_space<vmem>>, %arg20: memref<1x32xf32, #tpu.memory_space<vmem>>, %arg21: memref<1x32xf32, #tpu.memory_space<vmem>>, %arg22: memref<1x32xf32, #tpu.memory_space<vmem>>, %arg23: memref<1x32xf32, #tpu.memory_space<vmem>>, %arg24: memref<32x64xf32, #tpu.memory_space<vmem>>, %arg25: memref<1x64xf32, #tpu.memory_space<vmem>>, %arg26: memref<64x32xf32, #tpu.memory_space<vmem>>, %arg27: memref<1x32xf32, #tpu.memory_space<vmem>>, %arg28: memref<1x32xf32, #tpu.memory_space<vmem>>, %arg29: memref<1x32xf32, #tpu.memory_space<vmem>>, %arg30: memref<2x8x32xf32, #tpu.memory_space<vmem>>) attributes {dimension_semantics = [], scalar_prefetch = 0 : i64, scratch_operands = 0 : i64, tpu.core_type = #tpu.core_type<tc>} {
    %c0 = arith.constant 0 : index
    %c0_0 = arith.constant 0 : index
    %c0_1 = arith.constant 0 : index
    %0 = vector.load %arg0[%c0, %c0_0, %c0_1] : memref<2x8x32xf32, #tpu.memory_space<vmem>>, vector<2x8x32xf32>
    %1 = vector.shape_cast %0 : vector<2x8x32xf32> to vector<16x32xf32>
    %c0_2 = arith.constant 0 : index
    %c0_3 = arith.constant 0 : index
    %c0_4 = arith.constant 0 : index
    %2 = vector.load %arg1[%c0_2, %c0_3, %c0_4] : memref<2x8x32xf32, #tpu.memory_space<vmem>>, vector<2x8x32xf32>
    %3 = vector.shape_cast %2 : vector<2x8x32xf32> to vector<16x32xf32>
    %c0_5 = arith.constant 0 : index
    %c0_6 = arith.constant 0 : index
    %c0_7 = arith.constant 0 : index
    %4 = vector.load %arg2[%c0_5, %c0_6, %c0_7] : memref<2x8x32xf32, #tpu.memory_space<vmem>>, vector<2x8x32xf32>
    %5 = vector.shape_cast %4 : vector<2x8x32xf32> to vector<16x32xf32>
    %c0_8 = arith.constant 0 : index
    %c0_9 = arith.constant 0 : index
    %c0_10 = arith.constant 0 : index
    %6 = vector.load %arg3[%c0_8, %c0_9, %c0_10] : memref<2x8x32xf32, #tpu.memory_space<vmem>>, vector<2x8x32xf32>
    %7 = vector.shape_cast %6 : vector<2x8x32xf32> to vector<16x32xf32>
    %8 = arith.addf %1, %5 : vector<16x32xf32>
    %c0_11 = arith.constant 0 : index
    %c0_12 = arith.constant 0 : index
    %9 = vector.load %arg4[%c0_11, %c0_12] : memref<32x32xf32, #tpu.memory_space<vmem>>, vector<32x32xf32>
    %cst = arith.constant dense<0.000000e+00> : vector<16x32xf32>
    %10 = tpu.matmul %8, %9, %cst {dimension_numbers = #tpu.dot_dimension_numbers<[1], [0], [0], [1], [0, 0, 1, 1], [], []>} : vector<16x32xf32>, vector<32x32xf32>, vector<16x32xf32> -> vector<16x32xf32>
    %c0_13 = arith.constant 0 : index
    %c0_14 = arith.constant 0 : index
    %11 = vector.load %arg8[%c0_13, %c0_14] : memref<1x32xf32, #tpu.memory_space<vmem>>, vector<1x32xf32>
    %12 = vector.broadcast %11 : vector<1x32xf32> to vector<16x32xf32>
    %13 = arith.addf %10, %12 : vector<16x32xf32>
    %c0_15 = arith.constant 0 : index
    %c0_16 = arith.constant 0 : index
    %14 = vector.load %arg5[%c0_15, %c0_16] : memref<32x32xf32, #tpu.memory_space<vmem>>, vector<32x32xf32>
    %cst_17 = arith.constant dense<0.000000e+00> : vector<16x32xf32>
    %15 = tpu.matmul %8, %14, %cst_17 {dimension_numbers = #tpu.dot_dimension_numbers<[1], [0], [0], [1], [0, 0, 1, 1], [], []>} : vector<16x32xf32>, vector<32x32xf32>, vector<16x32xf32> -> vector<16x32xf32>
    %c0_18 = arith.constant 0 : index
    %c0_19 = arith.constant 0 : index
    %16 = vector.load %arg9[%c0_18, %c0_19] : memref<1x32xf32, #tpu.memory_space<vmem>>, vector<1x32xf32>
    %17 = vector.broadcast %16 : vector<1x32xf32> to vector<16x32xf32>
    %18 = arith.addf %15, %17 : vector<16x32xf32>
    %c0_20 = arith.constant 0 : index
    %c0_21 = arith.constant 0 : index
    %19 = vector.load %arg6[%c0_20, %c0_21] : memref<32x32xf32, #tpu.memory_space<vmem>>, vector<32x32xf32>
    %cst_22 = arith.constant dense<0.000000e+00> : vector<16x32xf32>
    %20 = tpu.matmul %1, %19, %cst_22 {dimension_numbers = #tpu.dot_dimension_numbers<[1], [0], [0], [1], [0, 0, 1, 1], [], []>} : vector<16x32xf32>, vector<32x32xf32>, vector<16x32xf32> -> vector<16x32xf32>
    %c0_23 = arith.constant 0 : index
    %c0_24 = arith.constant 0 : index
    %21 = vector.load %arg10[%c0_23, %c0_24] : memref<1x32xf32, #tpu.memory_space<vmem>>, vector<1x32xf32>
    %22 = vector.broadcast %21 : vector<1x32xf32> to vector<16x32xf32>
    %23 = arith.addf %20, %22 : vector<16x32xf32>
    %cst_25 = arith.constant 0.353553385 : f32
    %24 = vector.broadcast %cst_25 : f32 to vector<16x32xf32>
    %25 = arith.mulf %13, %24 : vector<16x32xf32>
    %26 = vector.shape_cast %25 : vector<16x32xf32> to vector<2x8x32xf32>
    %27 = vector.shape_cast %18 : vector<16x32xf32> to vector<2x8x32xf32>
    %28 = vector.shape_cast %23 : vector<16x32xf32> to vector<2x8x32xf32>
    %c0_26 = arith.constant 0 : index
    %c0_27 = arith.constant 0 : index
    %29 = vector.load %arg7[%c0_26, %c0_27] : memref<32x32xf32, #tpu.memory_space<vmem>>, vector<32x32xf32>
    %cst_28 = arith.constant 0.000000e+00 : f32
    %30 = vector.broadcast %cst_28 : f32 to vector<16x32xf32>
    %31 = vector.extract_strided_slice %26 {offsets = [0, 0, 0], sizes = [2, 8, 8], strides = [1, 1, 1]} : vector<2x8x32xf32> to vector<2x8x8xf32>
    %32 = vector.extract_strided_slice %27 {offsets = [0, 0, 0], sizes = [2, 8, 8], strides = [1, 1, 1]} : vector<2x8x32xf32> to vector<2x8x8xf32>
    "tpu.trace_start"() <{level = 10 : i32, message = "bqd,bkd->bqk"}> : () -> ()
    %cst_29 = arith.constant dense<0.000000e+00> : vector<2x8x8xf32>
    %33 = tpu.matmul %31, %32, %cst_29 {dimension_numbers = #tpu.dot_dimension_numbers<[2], [2], [1], [1], [0, 0, 0, 1, 1, 1], [0], [0]>} : vector<2x8x8xf32>, vector<2x8x8xf32>, vector<2x8x8xf32> -> vector<2x8x8xf32>
    "tpu.trace_stop"() : () -> ()
    %cst_30 = arith.constant dense<0xFF800000> : vector<2x8xf32>
    %34 = vector.multi_reduction <maximumf>, %33, %cst_30 [2] : vector<2x8x8xf32> to vector<2x8xf32>
    %35 = vector.shape_cast %34 : vector<2x8xf32> to vector<2x8x1xf32>
    %36 = vector.broadcast %35 : vector<2x8x1xf32> to vector<2x8x8xf32>
    %37 = arith.subf %33, %36 : vector<2x8x8xf32>
    %38 = math.exp %37 : vector<2x8x8xf32>
    %cst_31 = arith.constant dense<0.000000e+00> : vector<2x8xf32>
    %39 = vector.multi_reduction <add>, %38, %cst_31 [2] : vector<2x8x8xf32> to vector<2x8xf32>
    %40 = vector.shape_cast %39 : vector<2x8xf32> to vector<2x8x1xf32>
    %41 = tpu.reciprocal %40 {approx = true} : vector<2x8x1xf32> -> vector<2x8x1xf32>
    %42 = vector.broadcast %41 : vector<2x8x1xf32> to vector<2x8x8xf32>
    %43 = arith.mulf %38, %42 : vector<2x8x8xf32>
    %44 = vector.extract_strided_slice %28 {offsets = [0, 0, 0], sizes = [2, 8, 8], strides = [1, 1, 1]} : vector<2x8x32xf32> to vector<2x8x8xf32>
    "tpu.trace_start"() <{level = 10 : i32, message = "bqk,bkd->bqd"}> : () -> ()
    %cst_32 = arith.constant dense<0.000000e+00> : vector<2x8x8xf32>
    %45 = tpu.matmul %43, %44, %cst_32 {dimension_numbers = #tpu.dot_dimension_numbers<[2], [1], [1], [2], [0, 0, 0, 1, 1, 2], [0], [0]>} : vector<2x8x8xf32>, vector<2x8x8xf32>, vector<2x8x8xf32> -> vector<2x8x8xf32>
    "tpu.trace_stop"() : () -> ()
    %46 = vector.shape_cast %45 : vector<2x8x8xf32> to vector<16x8xf32>
    %47 = vector.extract_strided_slice %29 {offsets = [0, 0], sizes = [8, 32], strides = [1, 1]} : vector<32x32xf32> to vector<8x32xf32>
    %cst_33 = arith.constant dense<0.000000e+00> : vector<16x32xf32>
    %48 = tpu.matmul %46, %47, %cst_33 {dimension_numbers = #tpu.dot_dimension_numbers<[1], [0], [0], [1], [0, 0, 1, 1], [], []>} : vector<16x8xf32>, vector<8x32xf32>, vector<16x32xf32> -> vector<16x32xf32>
    %49 = arith.addf %30, %48 : vector<16x32xf32>
    %50 = vector.extract_strided_slice %26 {offsets = [0, 0, 8], sizes = [2, 8, 8], strides = [1, 1, 1]} : vector<2x8x32xf32> to vector<2x8x8xf32>
    %51 = vector.extract_strided_slice %27 {offsets = [0, 0, 8], sizes = [2, 8, 8], strides = [1, 1, 1]} : vector<2x8x32xf32> to vector<2x8x8xf32>
    "tpu.trace_start"() <{level = 10 : i32, message = "bqd,bkd->bqk"}> : () -> ()
    %cst_34 = arith.constant dense<0.000000e+00> : vector<2x8x8xf32>
    %52 = tpu.matmul %50, %51, %cst_34 {dimension_numbers = #tpu.dot_dimension_numbers<[2], [2], [1], [1], [0, 0, 0, 1, 1, 1], [0], [0]>} : vector<2x8x8xf32>, vector<2x8x8xf32>, vector<2x8x8xf32> -> vector<2x8x8xf32>
    "tpu.trace_stop"() : () -> ()
    %cst_35 = arith.constant dense<0xFF800000> : vector<2x8xf32>
    %53 = vector.multi_reduction <maximumf>, %52, %cst_35 [2] : vector<2x8x8xf32> to vector<2x8xf32>
    %54 = vector.shape_cast %53 : vector<2x8xf32> to vector<2x8x1xf32>
    %55 = vector.broadcast %54 : vector<2x8x1xf32> to vector<2x8x8xf32>
    %56 = arith.subf %52, %55 : vector<2x8x8xf32>
    %57 = math.exp %56 : vector<2x8x8xf32>
    %cst_36 = arith.constant dense<0.000000e+00> : vector<2x8xf32>
    %58 = vector.multi_reduction <add>, %57, %cst_36 [2] : vector<2x8x8xf32> to vector<2x8xf32>
    %59 = vector.shape_cast %58 : vector<2x8xf32> to vector<2x8x1xf32>
    %60 = tpu.reciprocal %59 {approx = true} : vector<2x8x1xf32> -> vector<2x8x1xf32>
    %61 = vector.broadcast %60 : vector<2x8x1xf32> to vector<2x8x8xf32>
    %62 = arith.mulf %57, %61 : vector<2x8x8xf32>
    %63 = vector.extract_strided_slice %28 {offsets = [0, 0, 8], sizes = [2, 8, 8], strides = [1, 1, 1]} : vector<2x8x32xf32> to vector<2x8x8xf32>
    "tpu.trace_start"() <{level = 10 : i32, message = "bqk,bkd->bqd"}> : () -> ()
    %cst_37 = arith.constant dense<0.000000e+00> : vector<2x8x8xf32>
    %64 = tpu.matmul %62, %63, %cst_37 {dimension_numbers = #tpu.dot_dimension_numbers<[2], [1], [1], [2], [0, 0, 0, 1, 1, 2], [0], [0]>} : vector<2x8x8xf32>, vector<2x8x8xf32>, vector<2x8x8xf32> -> vector<2x8x8xf32>
    "tpu.trace_stop"() : () -> ()
    %65 = vector.shape_cast %64 : vector<2x8x8xf32> to vector<16x8xf32>
    %66 = vector.extract_strided_slice %29 {offsets = [8, 0], sizes = [8, 32], strides = [1, 1]} : vector<32x32xf32> to vector<8x32xf32>
    %cst_38 = arith.constant dense<0.000000e+00> : vector<16x32xf32>
    %67 = tpu.matmul %65, %66, %cst_38 {dimension_numbers = #tpu.dot_dimension_numbers<[1], [0], [0], [1], [0, 0, 1, 1], [], []>} : vector<16x8xf32>, vector<8x32xf32>, vector<16x32xf32> -> vector<16x32xf32>
    %68 = arith.addf %49, %67 : vector<16x32xf32>
    %69 = vector.extract_strided_slice %26 {offsets = [0, 0, 16], sizes = [2, 8, 8], strides = [1, 1, 1]} : vector<2x8x32xf32> to vector<2x8x8xf32>
    %70 = vector.extract_strided_slice %27 {offsets = [0, 0, 16], sizes = [2, 8, 8], strides = [1, 1, 1]} : vector<2x8x32xf32> to vector<2x8x8xf32>
    "tpu.trace_start"() <{level = 10 : i32, message = "bqd,bkd->bqk"}> : () -> ()
    %cst_39 = arith.constant dense<0.000000e+00> : vector<2x8x8xf32>
    %71 = tpu.matmul %69, %70, %cst_39 {dimension_numbers = #tpu.dot_dimension_numbers<[2], [2], [1], [1], [0, 0, 0, 1, 1, 1], [0], [0]>} : vector<2x8x8xf32>, vector<2x8x8xf32>, vector<2x8x8xf32> -> vector<2x8x8xf32>
    "tpu.trace_stop"() : () -> ()
    %cst_40 = arith.constant dense<0xFF800000> : vector<2x8xf32>
    %72 = vector.multi_reduction <maximumf>, %71, %cst_40 [2] : vector<2x8x8xf32> to vector<2x8xf32>
    %73 = vector.shape_cast %72 : vector<2x8xf32> to vector<2x8x1xf32>
    %74 = vector.broadcast %73 : vector<2x8x1xf32> to vector<2x8x8xf32>
    %75 = arith.subf %71, %74 : vector<2x8x8xf32>
    %76 = math.exp %75 : vector<2x8x8xf32>
    %cst_41 = arith.constant dense<0.000000e+00> : vector<2x8xf32>
    %77 = vector.multi_reduction <add>, %76, %cst_41 [2] : vector<2x8x8xf32> to vector<2x8xf32>
    %78 = vector.shape_cast %77 : vector<2x8xf32> to vector<2x8x1xf32>
    %79 = tpu.reciprocal %78 {approx = true} : vector<2x8x1xf32> -> vector<2x8x1xf32>
    %80 = vector.broadcast %79 : vector<2x8x1xf32> to vector<2x8x8xf32>
    %81 = arith.mulf %76, %80 : vector<2x8x8xf32>
    %82 = vector.extract_strided_slice %28 {offsets = [0, 0, 16], sizes = [2, 8, 8], strides = [1, 1, 1]} : vector<2x8x32xf32> to vector<2x8x8xf32>
    "tpu.trace_start"() <{level = 10 : i32, message = "bqk,bkd->bqd"}> : () -> ()
    %cst_42 = arith.constant dense<0.000000e+00> : vector<2x8x8xf32>
    %83 = tpu.matmul %81, %82, %cst_42 {dimension_numbers = #tpu.dot_dimension_numbers<[2], [1], [1], [2], [0, 0, 0, 1, 1, 2], [0], [0]>} : vector<2x8x8xf32>, vector<2x8x8xf32>, vector<2x8x8xf32> -> vector<2x8x8xf32>
    "tpu.trace_stop"() : () -> ()
    %84 = vector.shape_cast %83 : vector<2x8x8xf32> to vector<16x8xf32>
    %85 = vector.extract_strided_slice %29 {offsets = [16, 0], sizes = [8, 32], strides = [1, 1]} : vector<32x32xf32> to vector<8x32xf32>
    %cst_43 = arith.constant dense<0.000000e+00> : vector<16x32xf32>
    %86 = tpu.matmul %84, %85, %cst_43 {dimension_numbers = #tpu.dot_dimension_numbers<[1], [0], [0], [1], [0, 0, 1, 1], [], []>} : vector<16x8xf32>, vector<8x32xf32>, vector<16x32xf32> -> vector<16x32xf32>
    %87 = arith.addf %68, %86 : vector<16x32xf32>
    %88 = vector.extract_strided_slice %26 {offsets = [0, 0, 24], sizes = [2, 8, 8], strides = [1, 1, 1]} : vector<2x8x32xf32> to vector<2x8x8xf32>
    %89 = vector.extract_strided_slice %27 {offsets = [0, 0, 24], sizes = [2, 8, 8], strides = [1, 1, 1]} : vector<2x8x32xf32> to vector<2x8x8xf32>
    "tpu.trace_start"() <{level = 10 : i32, message = "bqd,bkd->bqk"}> : () -> ()
    %cst_44 = arith.constant dense<0.000000e+00> : vector<2x8x8xf32>
    %90 = tpu.matmul %88, %89, %cst_44 {dimension_numbers = #tpu.dot_dimension_numbers<[2], [2], [1], [1], [0, 0, 0, 1, 1, 1], [0], [0]>} : vector<2x8x8xf32>, vector<2x8x8xf32>, vector<2x8x8xf32> -> vector<2x8x8xf32>
    "tpu.trace_stop"() : () -> ()
    %cst_45 = arith.constant dense<0xFF800000> : vector<2x8xf32>
    %91 = vector.multi_reduction <maximumf>, %90, %cst_45 [2] : vector<2x8x8xf32> to vector<2x8xf32>
    %92 = vector.shape_cast %91 : vector<2x8xf32> to vector<2x8x1xf32>
    %93 = vector.broadcast %92 : vector<2x8x1xf32> to vector<2x8x8xf32>
    %94 = arith.subf %90, %93 : vector<2x8x8xf32>
    %95 = math.exp %94 : vector<2x8x8xf32>
    %cst_46 = arith.constant dense<0.000000e+00> : vector<2x8xf32>
    %96 = vector.multi_reduction <add>, %95, %cst_46 [2] : vector<2x8x8xf32> to vector<2x8xf32>
    %97 = vector.shape_cast %96 : vector<2x8xf32> to vector<2x8x1xf32>
    %98 = tpu.reciprocal %97 {approx = true} : vector<2x8x1xf32> -> vector<2x8x1xf32>
    %99 = vector.broadcast %98 : vector<2x8x1xf32> to vector<2x8x8xf32>
    %100 = arith.mulf %95, %99 : vector<2x8x8xf32>
    %101 = vector.extract_strided_slice %28 {offsets = [0, 0, 24], sizes = [2, 8, 8], strides = [1, 1, 1]} : vector<2x8x32xf32> to vector<2x8x8xf32>
    "tpu.trace_start"() <{level = 10 : i32, message = "bqk,bkd->bqd"}> : () -> ()
    %cst_47 = arith.constant dense<0.000000e+00> : vector<2x8x8xf32>
    %102 = tpu.matmul %100, %101, %cst_47 {dimension_numbers = #tpu.dot_dimension_numbers<[2], [1], [1], [2], [0, 0, 0, 1, 1, 2], [0], [0]>} : vector<2x8x8xf32>, vector<2x8x8xf32>, vector<2x8x8xf32> -> vector<2x8x8xf32>
    "tpu.trace_stop"() : () -> ()
    %103 = vector.shape_cast %102 : vector<2x8x8xf32> to vector<16x8xf32>
    %104 = vector.extract_strided_slice %29 {offsets = [24, 0], sizes = [8, 32], strides = [1, 1]} : vector<32x32xf32> to vector<8x32xf32>
    %cst_48 = arith.constant dense<0.000000e+00> : vector<16x32xf32>
    %105 = tpu.matmul %103, %104, %cst_48 {dimension_numbers = #tpu.dot_dimension_numbers<[1], [0], [0], [1], [0, 0, 1, 1], [], []>} : vector<16x8xf32>, vector<8x32xf32>, vector<16x32xf32> -> vector<16x32xf32>
    %106 = arith.addf %87, %105 : vector<16x32xf32>
    %c0_49 = arith.constant 0 : index
    %c0_50 = arith.constant 0 : index
    %107 = vector.load %arg11[%c0_49, %c0_50] : memref<1x32xf32, #tpu.memory_space<vmem>>, vector<1x32xf32>
    %108 = vector.broadcast %107 : vector<1x32xf32> to vector<16x32xf32>
    %109 = arith.addf %106, %108 : vector<16x32xf32>
    %110 = arith.addf %1, %109 : vector<16x32xf32>
    %cst_51 = arith.constant dense<0.000000e+00> : vector<16xf32>
    %111 = vector.multi_reduction <add>, %110, %cst_51 [1] : vector<16x32xf32> to vector<16xf32>
    %112 = vector.shape_cast %111 : vector<16xf32> to vector<16x1xf32>
    %cst_52 = arith.constant 3.200000e+01 : f32
    %113 = vector.broadcast %cst_52 : f32 to vector<16x1xf32>
    %114 = arith.divf %112, %113 : vector<16x1xf32>
    %115 = vector.broadcast %114 : vector<16x1xf32> to vector<16x32xf32>
    %116 = arith.subf %110, %115 : vector<16x32xf32>
    %117 = arith.mulf %116, %116 : vector<16x32xf32>
    %cst_53 = arith.constant dense<0.000000e+00> : vector<16xf32>
    %118 = vector.multi_reduction <add>, %117, %cst_53 [1] : vector<16x32xf32> to vector<16xf32>
    %119 = vector.shape_cast %118 : vector<16xf32> to vector<16x1xf32>
    %cst_54 = arith.constant 3.200000e+01 : f32
    %120 = vector.broadcast %cst_54 : f32 to vector<16x1xf32>
    %121 = arith.divf %119, %120 : vector<16x1xf32>
    %cst_55 = arith.constant 9.99999974E-6 : f32
    %122 = vector.broadcast %cst_55 : f32 to vector<16x1xf32>
    %123 = arith.addf %121, %122 : vector<16x1xf32>
    %124 = math.rsqrt %123 : vector<16x1xf32>
    %125 = vector.broadcast %124 : vector<16x1xf32> to vector<16x32xf32>
    %126 = arith.mulf %116, %125 : vector<16x32xf32>
    %c0_56 = arith.constant 0 : index
    %c0_57 = arith.constant 0 : index
    %127 = vector.load %arg12[%c0_56, %c0_57] : memref<1x32xf32, #tpu.memory_space<vmem>>, vector<1x32xf32>
    %128 = vector.broadcast %127 : vector<1x32xf32> to vector<16x32xf32>
    %129 = arith.mulf %126, %128 : vector<16x32xf32>
    %c0_58 = arith.constant 0 : index
    %c0_59 = arith.constant 0 : index
    %130 = vector.load %arg13[%c0_58, %c0_59] : memref<1x32xf32, #tpu.memory_space<vmem>>, vector<1x32xf32>
    %131 = vector.broadcast %130 : vector<1x32xf32> to vector<16x32xf32>
    %132 = arith.addf %129, %131 : vector<16x32xf32>
    %133 = arith.addf %132, %5 : vector<16x32xf32>
    %134 = arith.addf %3, %7 : vector<16x32xf32>
    %c0_60 = arith.constant 0 : index
    %c0_61 = arith.constant 0 : index
    %135 = vector.load %arg14[%c0_60, %c0_61] : memref<32x32xf32, #tpu.memory_space<vmem>>, vector<32x32xf32>
    %cst_62 = arith.constant dense<0.000000e+00> : vector<16x32xf32>
    %136 = tpu.matmul %133, %135, %cst_62 {dimension_numbers = #tpu.dot_dimension_numbers<[1], [0], [0], [1], [0, 0, 1, 1], [], []>} : vector<16x32xf32>, vector<32x32xf32>, vector<16x32xf32> -> vector<16x32xf32>
    %c0_63 = arith.constant 0 : index
    %c0_64 = arith.constant 0 : index
    %137 = vector.load %arg18[%c0_63, %c0_64] : memref<1x32xf32, #tpu.memory_space<vmem>>, vector<1x32xf32>
    %138 = vector.broadcast %137 : vector<1x32xf32> to vector<16x32xf32>
    %139 = arith.addf %136, %138 : vector<16x32xf32>
    %c0_65 = arith.constant 0 : index
    %c0_66 = arith.constant 0 : index
    %140 = vector.load %arg15[%c0_65, %c0_66] : memref<32x32xf32, #tpu.memory_space<vmem>>, vector<32x32xf32>
    %cst_67 = arith.constant dense<0.000000e+00> : vector<16x32xf32>
    %141 = tpu.matmul %134, %140, %cst_67 {dimension_numbers = #tpu.dot_dimension_numbers<[1], [0], [0], [1], [0, 0, 1, 1], [], []>} : vector<16x32xf32>, vector<32x32xf32>, vector<16x32xf32> -> vector<16x32xf32>
    %c0_68 = arith.constant 0 : index
    %c0_69 = arith.constant 0 : index
    %142 = vector.load %arg19[%c0_68, %c0_69] : memref<1x32xf32, #tpu.memory_space<vmem>>, vector<1x32xf32>
    %143 = vector.broadcast %142 : vector<1x32xf32> to vector<16x32xf32>
    %144 = arith.addf %141, %143 : vector<16x32xf32>
    %c0_70 = arith.constant 0 : index
    %c0_71 = arith.constant 0 : index
    %145 = vector.load %arg16[%c0_70, %c0_71] : memref<32x32xf32, #tpu.memory_space<vmem>>, vector<32x32xf32>
    %cst_72 = arith.constant dense<0.000000e+00> : vector<16x32xf32>
    %146 = tpu.matmul %3, %145, %cst_72 {dimension_numbers = #tpu.dot_dimension_numbers<[1], [0], [0], [1], [0, 0, 1, 1], [], []>} : vector<16x32xf32>, vector<32x32xf32>, vector<16x32xf32> -> vector<16x32xf32>
    %c0_73 = arith.constant 0 : index
    %c0_74 = arith.constant 0 : index
    %147 = vector.load %arg20[%c0_73, %c0_74] : memref<1x32xf32, #tpu.memory_space<vmem>>, vector<1x32xf32>
    %148 = vector.broadcast %147 : vector<1x32xf32> to vector<16x32xf32>
    %149 = arith.addf %146, %148 : vector<16x32xf32>
    %cst_75 = arith.constant 0.353553385 : f32
    %150 = vector.broadcast %cst_75 : f32 to vector<16x32xf32>
    %151 = arith.mulf %139, %150 : vector<16x32xf32>
    %152 = vector.shape_cast %151 : vector<16x32xf32> to vector<2x8x32xf32>
    %153 = vector.shape_cast %144 : vector<16x32xf32> to vector<2x8x32xf32>
    %154 = vector.shape_cast %149 : vector<16x32xf32> to vector<2x8x32xf32>
    %c0_76 = arith.constant 0 : index
    %c0_77 = arith.constant 0 : index
    %155 = vector.load %arg17[%c0_76, %c0_77] : memref<32x32xf32, #tpu.memory_space<vmem>>, vector<32x32xf32>
    %cst_78 = arith.constant 0.000000e+00 : f32
    %156 = vector.broadcast %cst_78 : f32 to vector<16x32xf32>
    %157 = vector.extract_strided_slice %152 {offsets = [0, 0, 0], sizes = [2, 8, 8], strides = [1, 1, 1]} : vector<2x8x32xf32> to vector<2x8x8xf32>
    %158 = vector.extract_strided_slice %153 {offsets = [0, 0, 0], sizes = [2, 8, 8], strides = [1, 1, 1]} : vector<2x8x32xf32> to vector<2x8x8xf32>
    "tpu.trace_start"() <{level = 10 : i32, message = "bqd,bkd->bqk"}> : () -> ()
    %cst_79 = arith.constant dense<0.000000e+00> : vector<2x8x8xf32>
    %159 = tpu.matmul %157, %158, %cst_79 {dimension_numbers = #tpu.dot_dimension_numbers<[2], [2], [1], [1], [0, 0, 0, 1, 1, 1], [0], [0]>} : vector<2x8x8xf32>, vector<2x8x8xf32>, vector<2x8x8xf32> -> vector<2x8x8xf32>
    "tpu.trace_stop"() : () -> ()
    %cst_80 = arith.constant dense<0xFF800000> : vector<2x8xf32>
    %160 = vector.multi_reduction <maximumf>, %159, %cst_80 [2] : vector<2x8x8xf32> to vector<2x8xf32>
    %161 = vector.shape_cast %160 : vector<2x8xf32> to vector<2x8x1xf32>
    %162 = vector.broadcast %161 : vector<2x8x1xf32> to vector<2x8x8xf32>
    %163 = arith.subf %159, %162 : vector<2x8x8xf32>
    %164 = math.exp %163 : vector<2x8x8xf32>
    %cst_81 = arith.constant dense<0.000000e+00> : vector<2x8xf32>
    %165 = vector.multi_reduction <add>, %164, %cst_81 [2] : vector<2x8x8xf32> to vector<2x8xf32>
    %166 = vector.shape_cast %165 : vector<2x8xf32> to vector<2x8x1xf32>
    %167 = tpu.reciprocal %166 {approx = true} : vector<2x8x1xf32> -> vector<2x8x1xf32>
    %168 = vector.broadcast %167 : vector<2x8x1xf32> to vector<2x8x8xf32>
    %169 = arith.mulf %164, %168 : vector<2x8x8xf32>
    %170 = vector.extract_strided_slice %154 {offsets = [0, 0, 0], sizes = [2, 8, 8], strides = [1, 1, 1]} : vector<2x8x32xf32> to vector<2x8x8xf32>
    "tpu.trace_start"() <{level = 10 : i32, message = "bqk,bkd->bqd"}> : () -> ()
    %cst_82 = arith.constant dense<0.000000e+00> : vector<2x8x8xf32>
    %171 = tpu.matmul %169, %170, %cst_82 {dimension_numbers = #tpu.dot_dimension_numbers<[2], [1], [1], [2], [0, 0, 0, 1, 1, 2], [0], [0]>} : vector<2x8x8xf32>, vector<2x8x8xf32>, vector<2x8x8xf32> -> vector<2x8x8xf32>
    "tpu.trace_stop"() : () -> ()
    %172 = vector.shape_cast %171 : vector<2x8x8xf32> to vector<16x8xf32>
    %173 = vector.extract_strided_slice %155 {offsets = [0, 0], sizes = [8, 32], strides = [1, 1]} : vector<32x32xf32> to vector<8x32xf32>
    %cst_83 = arith.constant dense<0.000000e+00> : vector<16x32xf32>
    %174 = tpu.matmul %172, %173, %cst_83 {dimension_numbers = #tpu.dot_dimension_numbers<[1], [0], [0], [1], [0, 0, 1, 1], [], []>} : vector<16x8xf32>, vector<8x32xf32>, vector<16x32xf32> -> vector<16x32xf32>
    %175 = arith.addf %156, %174 : vector<16x32xf32>
    %176 = vector.extract_strided_slice %152 {offsets = [0, 0, 8], sizes = [2, 8, 8], strides = [1, 1, 1]} : vector<2x8x32xf32> to vector<2x8x8xf32>
    %177 = vector.extract_strided_slice %153 {offsets = [0, 0, 8], sizes = [2, 8, 8], strides = [1, 1, 1]} : vector<2x8x32xf32> to vector<2x8x8xf32>
    "tpu.trace_start"() <{level = 10 : i32, message = "bqd,bkd->bqk"}> : () -> ()
    %cst_84 = arith.constant dense<0.000000e+00> : vector<2x8x8xf32>
    %178 = tpu.matmul %176, %177, %cst_84 {dimension_numbers = #tpu.dot_dimension_numbers<[2], [2], [1], [1], [0, 0, 0, 1, 1, 1], [0], [0]>} : vector<2x8x8xf32>, vector<2x8x8xf32>, vector<2x8x8xf32> -> vector<2x8x8xf32>
    "tpu.trace_stop"() : () -> ()
    %cst_85 = arith.constant dense<0xFF800000> : vector<2x8xf32>
    %179 = vector.multi_reduction <maximumf>, %178, %cst_85 [2] : vector<2x8x8xf32> to vector<2x8xf32>
    %180 = vector.shape_cast %179 : vector<2x8xf32> to vector<2x8x1xf32>
    %181 = vector.broadcast %180 : vector<2x8x1xf32> to vector<2x8x8xf32>
    %182 = arith.subf %178, %181 : vector<2x8x8xf32>
    %183 = math.exp %182 : vector<2x8x8xf32>
    %cst_86 = arith.constant dense<0.000000e+00> : vector<2x8xf32>
    %184 = vector.multi_reduction <add>, %183, %cst_86 [2] : vector<2x8x8xf32> to vector<2x8xf32>
    %185 = vector.shape_cast %184 : vector<2x8xf32> to vector<2x8x1xf32>
    %186 = tpu.reciprocal %185 {approx = true} : vector<2x8x1xf32> -> vector<2x8x1xf32>
    %187 = vector.broadcast %186 : vector<2x8x1xf32> to vector<2x8x8xf32>
    %188 = arith.mulf %183, %187 : vector<2x8x8xf32>
    %189 = vector.extract_strided_slice %154 {offsets = [0, 0, 8], sizes = [2, 8, 8], strides = [1, 1, 1]} : vector<2x8x32xf32> to vector<2x8x8xf32>
    "tpu.trace_start"() <{level = 10 : i32, message = "bqk,bkd->bqd"}> : () -> ()
    %cst_87 = arith.constant dense<0.000000e+00> : vector<2x8x8xf32>
    %190 = tpu.matmul %188, %189, %cst_87 {dimension_numbers = #tpu.dot_dimension_numbers<[2], [1], [1], [2], [0, 0, 0, 1, 1, 2], [0], [0]>} : vector<2x8x8xf32>, vector<2x8x8xf32>, vector<2x8x8xf32> -> vector<2x8x8xf32>
    "tpu.trace_stop"() : () -> ()
    %191 = vector.shape_cast %190 : vector<2x8x8xf32> to vector<16x8xf32>
    %192 = vector.extract_strided_slice %155 {offsets = [8, 0], sizes = [8, 32], strides = [1, 1]} : vector<32x32xf32> to vector<8x32xf32>
    %cst_88 = arith.constant dense<0.000000e+00> : vector<16x32xf32>
    %193 = tpu.matmul %191, %192, %cst_88 {dimension_numbers = #tpu.dot_dimension_numbers<[1], [0], [0], [1], [0, 0, 1, 1], [], []>} : vector<16x8xf32>, vector<8x32xf32>, vector<16x32xf32> -> vector<16x32xf32>
    %194 = arith.addf %175, %193 : vector<16x32xf32>
    %195 = vector.extract_strided_slice %152 {offsets = [0, 0, 16], sizes = [2, 8, 8], strides = [1, 1, 1]} : vector<2x8x32xf32> to vector<2x8x8xf32>
    %196 = vector.extract_strided_slice %153 {offsets = [0, 0, 16], sizes = [2, 8, 8], strides = [1, 1, 1]} : vector<2x8x32xf32> to vector<2x8x8xf32>
    "tpu.trace_start"() <{level = 10 : i32, message = "bqd,bkd->bqk"}> : () -> ()
    %cst_89 = arith.constant dense<0.000000e+00> : vector<2x8x8xf32>
    %197 = tpu.matmul %195, %196, %cst_89 {dimension_numbers = #tpu.dot_dimension_numbers<[2], [2], [1], [1], [0, 0, 0, 1, 1, 1], [0], [0]>} : vector<2x8x8xf32>, vector<2x8x8xf32>, vector<2x8x8xf32> -> vector<2x8x8xf32>
    "tpu.trace_stop"() : () -> ()
    %cst_90 = arith.constant dense<0xFF800000> : vector<2x8xf32>
    %198 = vector.multi_reduction <maximumf>, %197, %cst_90 [2] : vector<2x8x8xf32> to vector<2x8xf32>
    %199 = vector.shape_cast %198 : vector<2x8xf32> to vector<2x8x1xf32>
    %200 = vector.broadcast %199 : vector<2x8x1xf32> to vector<2x8x8xf32>
    %201 = arith.subf %197, %200 : vector<2x8x8xf32>
    %202 = math.exp %201 : vector<2x8x8xf32>
    %cst_91 = arith.constant dense<0.000000e+00> : vector<2x8xf32>
    %203 = vector.multi_reduction <add>, %202, %cst_91 [2] : vector<2x8x8xf32> to vector<2x8xf32>
    %204 = vector.shape_cast %203 : vector<2x8xf32> to vector<2x8x1xf32>
    %205 = tpu.reciprocal %204 {approx = true} : vector<2x8x1xf32> -> vector<2x8x1xf32>
    %206 = vector.broadcast %205 : vector<2x8x1xf32> to vector<2x8x8xf32>
    %207 = arith.mulf %202, %206 : vector<2x8x8xf32>
    %208 = vector.extract_strided_slice %154 {offsets = [0, 0, 16], sizes = [2, 8, 8], strides = [1, 1, 1]} : vector<2x8x32xf32> to vector<2x8x8xf32>
    "tpu.trace_start"() <{level = 10 : i32, message = "bqk,bkd->bqd"}> : () -> ()
    %cst_92 = arith.constant dense<0.000000e+00> : vector<2x8x8xf32>
    %209 = tpu.matmul %207, %208, %cst_92 {dimension_numbers = #tpu.dot_dimension_numbers<[2], [1], [1], [2], [0, 0, 0, 1, 1, 2], [0], [0]>} : vector<2x8x8xf32>, vector<2x8x8xf32>, vector<2x8x8xf32> -> vector<2x8x8xf32>
    "tpu.trace_stop"() : () -> ()
    %210 = vector.shape_cast %209 : vector<2x8x8xf32> to vector<16x8xf32>
    %211 = vector.extract_strided_slice %155 {offsets = [16, 0], sizes = [8, 32], strides = [1, 1]} : vector<32x32xf32> to vector<8x32xf32>
    %cst_93 = arith.constant dense<0.000000e+00> : vector<16x32xf32>
    %212 = tpu.matmul %210, %211, %cst_93 {dimension_numbers = #tpu.dot_dimension_numbers<[1], [0], [0], [1], [0, 0, 1, 1], [], []>} : vector<16x8xf32>, vector<8x32xf32>, vector<16x32xf32> -> vector<16x32xf32>
    %213 = arith.addf %194, %212 : vector<16x32xf32>
    %214 = vector.extract_strided_slice %152 {offsets = [0, 0, 24], sizes = [2, 8, 8], strides = [1, 1, 1]} : vector<2x8x32xf32> to vector<2x8x8xf32>
    %215 = vector.extract_strided_slice %153 {offsets = [0, 0, 24], sizes = [2, 8, 8], strides = [1, 1, 1]} : vector<2x8x32xf32> to vector<2x8x8xf32>
    "tpu.trace_start"() <{level = 10 : i32, message = "bqd,bkd->bqk"}> : () -> ()
    %cst_94 = arith.constant dense<0.000000e+00> : vector<2x8x8xf32>
    %216 = tpu.matmul %214, %215, %cst_94 {dimension_numbers = #tpu.dot_dimension_numbers<[2], [2], [1], [1], [0, 0, 0, 1, 1, 1], [0], [0]>} : vector<2x8x8xf32>, vector<2x8x8xf32>, vector<2x8x8xf32> -> vector<2x8x8xf32>
    "tpu.trace_stop"() : () -> ()
    %cst_95 = arith.constant dense<0xFF800000> : vector<2x8xf32>
    %217 = vector.multi_reduction <maximumf>, %216, %cst_95 [2] : vector<2x8x8xf32> to vector<2x8xf32>
    %218 = vector.shape_cast %217 : vector<2x8xf32> to vector<2x8x1xf32>
    %219 = vector.broadcast %218 : vector<2x8x1xf32> to vector<2x8x8xf32>
    %220 = arith.subf %216, %219 : vector<2x8x8xf32>
    %221 = math.exp %220 : vector<2x8x8xf32>
    %cst_96 = arith.constant dense<0.000000e+00> : vector<2x8xf32>
    %222 = vector.multi_reduction <add>, %221, %cst_96 [2] : vector<2x8x8xf32> to vector<2x8xf32>
    %223 = vector.shape_cast %222 : vector<2x8xf32> to vector<2x8x1xf32>
    %224 = tpu.reciprocal %223 {approx = true} : vector<2x8x1xf32> -> vector<2x8x1xf32>
    %225 = vector.broadcast %224 : vector<2x8x1xf32> to vector<2x8x8xf32>
    %226 = arith.mulf %221, %225 : vector<2x8x8xf32>
    %227 = vector.extract_strided_slice %154 {offsets = [0, 0, 24], sizes = [2, 8, 8], strides = [1, 1, 1]} : vector<2x8x32xf32> to vector<2x8x8xf32>
    "tpu.trace_start"() <{level = 10 : i32, message = "bqk,bkd->bqd"}> : () -> ()
    %cst_97 = arith.constant dense<0.000000e+00> : vector<2x8x8xf32>
    %228 = tpu.matmul %226, %227, %cst_97 {dimension_numbers = #tpu.dot_dimension_numbers<[2], [1], [1], [2], [0, 0, 0, 1, 1, 2], [0], [0]>} : vector<2x8x8xf32>, vector<2x8x8xf32>, vector<2x8x8xf32> -> vector<2x8x8xf32>
    "tpu.trace_stop"() : () -> ()
    %229 = vector.shape_cast %228 : vector<2x8x8xf32> to vector<16x8xf32>
    %230 = vector.extract_strided_slice %155 {offsets = [24, 0], sizes = [8, 32], strides = [1, 1]} : vector<32x32xf32> to vector<8x32xf32>
    %cst_98 = arith.constant dense<0.000000e+00> : vector<16x32xf32>
    %231 = tpu.matmul %229, %230, %cst_98 {dimension_numbers = #tpu.dot_dimension_numbers<[1], [0], [0], [1], [0, 0, 1, 1], [], []>} : vector<16x8xf32>, vector<8x32xf32>, vector<16x32xf32> -> vector<16x32xf32>
    %232 = arith.addf %213, %231 : vector<16x32xf32>
    %c0_99 = arith.constant 0 : index
    %c0_100 = arith.constant 0 : index
    %233 = vector.load %arg21[%c0_99, %c0_100] : memref<1x32xf32, #tpu.memory_space<vmem>>, vector<1x32xf32>
    %234 = vector.broadcast %233 : vector<1x32xf32> to vector<16x32xf32>
    %235 = arith.addf %232, %234 : vector<16x32xf32>
    %236 = arith.addf %132, %235 : vector<16x32xf32>
    %cst_101 = arith.constant dense<0.000000e+00> : vector<16xf32>
    %237 = vector.multi_reduction <add>, %236, %cst_101 [1] : vector<16x32xf32> to vector<16xf32>
    %238 = vector.shape_cast %237 : vector<16xf32> to vector<16x1xf32>
    %cst_102 = arith.constant 3.200000e+01 : f32
    %239 = vector.broadcast %cst_102 : f32 to vector<16x1xf32>
    %240 = arith.divf %238, %239 : vector<16x1xf32>
    %241 = vector.broadcast %240 : vector<16x1xf32> to vector<16x32xf32>
    %242 = arith.subf %236, %241 : vector<16x32xf32>
    %243 = arith.mulf %242, %242 : vector<16x32xf32>
    %cst_103 = arith.constant dense<0.000000e+00> : vector<16xf32>
    %244 = vector.multi_reduction <add>, %243, %cst_103 [1] : vector<16x32xf32> to vector<16xf32>
    %245 = vector.shape_cast %244 : vector<16xf32> to vector<16x1xf32>
    %cst_104 = arith.constant 3.200000e+01 : f32
    %246 = vector.broadcast %cst_104 : f32 to vector<16x1xf32>
    %247 = arith.divf %245, %246 : vector<16x1xf32>
    %cst_105 = arith.constant 9.99999974E-6 : f32
    %248 = vector.broadcast %cst_105 : f32 to vector<16x1xf32>
    %249 = arith.addf %247, %248 : vector<16x1xf32>
    %250 = math.rsqrt %249 : vector<16x1xf32>
    %251 = vector.broadcast %250 : vector<16x1xf32> to vector<16x32xf32>
    %252 = arith.mulf %242, %251 : vector<16x32xf32>
    %c0_106 = arith.constant 0 : index
    %c0_107 = arith.constant 0 : index
    %253 = vector.load %arg22[%c0_106, %c0_107] : memref<1x32xf32, #tpu.memory_space<vmem>>, vector<1x32xf32>
    %254 = vector.broadcast %253 : vector<1x32xf32> to vector<16x32xf32>
    %255 = arith.mulf %252, %254 : vector<16x32xf32>
    %c0_108 = arith.constant 0 : index
    %c0_109 = arith.constant 0 : index
    %256 = vector.load %arg23[%c0_108, %c0_109] : memref<1x32xf32, #tpu.memory_space<vmem>>, vector<1x32xf32>
    %257 = vector.broadcast %256 : vector<1x32xf32> to vector<16x32xf32>
    %258 = arith.addf %255, %257 : vector<16x32xf32>
    %c0_110 = arith.constant 0 : index
    %c0_111 = arith.constant 0 : index
    %259 = vector.load %arg24[%c0_110, %c0_111] : memref<32x64xf32, #tpu.memory_space<vmem>>, vector<32x64xf32>
    %cst_112 = arith.constant dense<0.000000e+00> : vector<16x64xf32>
    %260 = tpu.matmul %258, %259, %cst_112 {dimension_numbers = #tpu.dot_dimension_numbers<[1], [0], [0], [1], [0, 0, 1, 1], [], []>} : vector<16x32xf32>, vector<32x64xf32>, vector<16x64xf32> -> vector<16x64xf32>
    %c0_113 = arith.constant 0 : index
    %c0_114 = arith.constant 0 : index
    %261 = vector.load %arg25[%c0_113, %c0_114] : memref<1x64xf32, #tpu.memory_space<vmem>>, vector<1x64xf32>
    %262 = vector.broadcast %261 : vector<1x64xf32> to vector<16x64xf32>
    %263 = arith.addf %260, %262 : vector<16x64xf32>
    %cst_115 = arith.constant 0.000000e+00 : f32
    %264 = vector.broadcast %cst_115 : f32 to vector<16x64xf32>
    %265 = arith.maximumf %263, %264 : vector<16x64xf32>
    %c0_116 = arith.constant 0 : index
    %c0_117 = arith.constant 0 : index
    %266 = vector.load %arg26[%c0_116, %c0_117] : memref<64x32xf32, #tpu.memory_space<vmem>>, vector<64x32xf32>
    %cst_118 = arith.constant dense<0.000000e+00> : vector<16x32xf32>
    %267 = tpu.matmul %265, %266, %cst_118 {dimension_numbers = #tpu.dot_dimension_numbers<[1], [0], [0], [1], [0, 0, 1, 1], [], []>} : vector<16x64xf32>, vector<64x32xf32>, vector<16x32xf32> -> vector<16x32xf32>
    %c0_119 = arith.constant 0 : index
    %c0_120 = arith.constant 0 : index
    %268 = vector.load %arg27[%c0_119, %c0_120] : memref<1x32xf32, #tpu.memory_space<vmem>>, vector<1x32xf32>
    %269 = vector.broadcast %268 : vector<1x32xf32> to vector<16x32xf32>
    %270 = arith.addf %267, %269 : vector<16x32xf32>
    %271 = arith.addf %258, %270 : vector<16x32xf32>
    %cst_121 = arith.constant dense<0.000000e+00> : vector<16xf32>
    %272 = vector.multi_reduction <add>, %271, %cst_121 [1] : vector<16x32xf32> to vector<16xf32>
    %273 = vector.shape_cast %272 : vector<16xf32> to vector<16x1xf32>
    %cst_122 = arith.constant 3.200000e+01 : f32
    %274 = vector.broadcast %cst_122 : f32 to vector<16x1xf32>
    %275 = arith.divf %273, %274 : vector<16x1xf32>
    %276 = vector.broadcast %275 : vector<16x1xf32> to vector<16x32xf32>
    %277 = arith.subf %271, %276 : vector<16x32xf32>
    %278 = arith.mulf %277, %277 : vector<16x32xf32>
    %cst_123 = arith.constant dense<0.000000e+00> : vector<16xf32>
    %279 = vector.multi_reduction <add>, %278, %cst_123 [1] : vector<16x32xf32> to vector<16xf32>
    %280 = vector.shape_cast %279 : vector<16xf32> to vector<16x1xf32>
    %cst_124 = arith.constant 3.200000e+01 : f32
    %281 = vector.broadcast %cst_124 : f32 to vector<16x1xf32>
    %282 = arith.divf %280, %281 : vector<16x1xf32>
    %cst_125 = arith.constant 9.99999974E-6 : f32
    %283 = vector.broadcast %cst_125 : f32 to vector<16x1xf32>
    %284 = arith.addf %282, %283 : vector<16x1xf32>
    %285 = math.rsqrt %284 : vector<16x1xf32>
    %286 = vector.broadcast %285 : vector<16x1xf32> to vector<16x32xf32>
    %287 = arith.mulf %277, %286 : vector<16x32xf32>
    %c0_126 = arith.constant 0 : index
    %c0_127 = arith.constant 0 : index
    %288 = vector.load %arg28[%c0_126, %c0_127] : memref<1x32xf32, #tpu.memory_space<vmem>>, vector<1x32xf32>
    %289 = vector.broadcast %288 : vector<1x32xf32> to vector<16x32xf32>
    %290 = arith.mulf %287, %289 : vector<16x32xf32>
    %c0_128 = arith.constant 0 : index
    %c0_129 = arith.constant 0 : index
    %291 = vector.load %arg29[%c0_128, %c0_129] : memref<1x32xf32, #tpu.memory_space<vmem>>, vector<1x32xf32>
    %292 = vector.broadcast %291 : vector<1x32xf32> to vector<16x32xf32>
    %293 = arith.addf %290, %292 : vector<16x32xf32>
    %294 = vector.shape_cast %293 : vector<16x32xf32> to vector<2x8x32xf32>
    %c0_130 = arith.constant 0 : index
    %c0_131 = arith.constant 0 : index
    %c0_132 = arith.constant 0 : index
    %295 = vector.load %arg30[%c0_130, %c0_131, %c0_132] : memref<2x8x32xf32, #tpu.memory_space<vmem>>, vector<2x8x32xf32>
    tpu.vector_store %arg30[%c0_130, %c0_131, %c0_132], %294 {strides = array<i32>} : memref<2x8x32xf32, #tpu.memory_space<vmem>>, vector<2x8x32xf32>,
    return
  }
}

</mosaic_0001>

<llo_original>
// kernel: tpu_custom_call.1
$region0: #{tpu_custom_call.1}
  #allocation0 [shape = 'u32[]', space=smem, size = 0x4, offset = 0x4, fixed_abs, tag = 'smem constant byte address 0x4 - core index']
  #allocation1 [shape = 'u32[72,128]{1,0:T(1,128)}', space=vmem, size = 0x9000, scoped, tag = 'internal scratch']
  %s0 = inlined_call_operand.smem [shape: u32[31], index: -1, kind: input, shape index: {}]
  %s1 = sld [smem:[%s0]]
  %s2 = scalar_lea.smem %s0, 1
  %s3 = sld [smem:[%s2]]
  %s4 = scalar_lea.smem %s0, 2
  %s5 = sld [smem:[%s4]]
  %s6 = scalar_lea.smem %s0, 3
  %s7 = sld [smem:[%s6]]
  %s8 = scalar_lea.smem %s0, 4
  %s9 = sld [smem:[%s8]]
  %s10 = scalar_lea.smem %s0, 5
  %s11 = sld [smem:[%s10]]
  %s12 = scalar_lea.smem %s0, 6
  %s13 = sld [smem:[%s12]]
  %s14 = scalar_lea.smem %s0, 7
  %s15 = sld [smem:[%s14]]
  %s16 = scalar_lea.smem %s0, 8
  %s17 = sld [smem:[%s16]]
  %s18 = scalar_lea.smem %s0, 9
  %s19 = sld [smem:[%s18]]
  %s20 = scalar_lea.smem %s0, 10
  %s21 = sld [smem:[%s20]]
  %s22 = scalar_lea.smem %s0, 11
  %s23 = sld [smem:[%s22]]
  %s24 = scalar_lea.smem %s0, 12
  %s25 = sld [smem:[%s24]]
  %s26 = scalar_lea.smem %s0, 13
  %s27 = sld [smem:[%s26]]
  %s28 = scalar_lea.smem %s0, 14
  %s29 = sld [smem:[%s28]]
  %s30 = scalar_lea.smem %s0, 15
  %s31 = sld [smem:[%s30]]
  %s32 = scalar_lea.smem %s0, 16
  %s33 = sld [smem:[%s32]]
  %s34 = scalar_lea.smem %s0, 17
  %s35 = sld [smem:[%s34]]
  %s36 = scalar_lea.smem %s0, 18
  %s37 = sld [smem:[%s36]]
  %s38 = scalar_lea.smem %s0, 19
  %s39 = sld [smem:[%s38]]
  %s40 = scalar_lea.smem %s0, 20
  %s41 = sld [smem:[%s40]]
  %s42 = scalar_lea.smem %s0, 21
  %s43 = sld [smem:[%s42]]
  %s44 = scalar_lea.smem %s0, 22
  %s45 = sld [smem:[%s44]]
  %s46 = scalar_lea.smem %s0, 23
  %s47 = sld [smem:[%s46]]
  %s48 = scalar_lea.smem %s0, 24
  %s49 = sld [smem:[%s48]]
  %s50 = scalar_lea.smem %s0, 25
  %s51 = sld [smem:[%s50]]
  %s52 = scalar_lea.smem %s0, 26
  %s53 = sld [smem:[%s52]]
  %s54 = scalar_lea.smem %s0, 27
  %s55 = sld [smem:[%s54]]
  %s56 = scalar_lea.smem %s0, 28
  %s57 = sld [smem:[%s56]]
  %s58 = scalar_lea.smem %s0, 29
  %s59 = sld [smem:[%s58]]
  %s60 = scalar_lea.smem %s0, 30
  %s61 = sld [smem:[%s60]]
  %s62 = sld [smem:[#allocation0]]
  $region170: #{tpu_custom_call.1} parent=0
    _
  %s64 = ssub.s32 1, %s62
  %s65 = scalar_select 0, %s64, %s62
  $region1: #{tpu_custom_call.1} parent=0
    #allocation2 [shape = 'u8[8192]{0}', space=vmem, size = 0x2000, scoped, tag = 'input window, operand 0, single buffered']
    #allocation3 [shape = 's32[1]{0}', space=sflag, size = 0x4, scoped, tag = 'scoped memory for tpu_custom_call.1']
    #allocation4 [shape = 's32[1]{0}', space=sflag, size = 0x4, scoped, tag = 'scoped memory for tpu_custom_call.1']
    #allocation5 [shape = 'u8[8192]{0}', space=vmem, size = 0x2000, scoped, tag = 'input window, operand 1, single buffered']
    #allocation6 [shape = 's32[1]{0}', space=sflag, size = 0x4, scoped, tag = 'scoped memory for tpu_custom_call.1']
    #allocation7 [shape = 'u8[8192]{0}', space=vmem, size = 0x2000, scoped, tag = 'input window, operand 2, single buffered']
    #allocation8 [shape = 'u8[8192]{0}', space=vmem, size = 0x2000, scoped, tag = 'input window, operand 3, single buffered']
    #allocation9 [shape = 's32[1]{0}', space=sflag, size = 0x4, scoped, tag = 'scoped memory for tpu_custom_call.1']
    #allocation10 [shape = 'u8[16384]{0}', space=vmem, size = 0x4000, scoped, tag = 'input window, operand 7, single buffered']
    #allocation11 [shape = 'u8[16384]{0}', space=vmem, size = 0x4000, scoped, tag = 'input window, operand 14, single buffered']
    #allocation12 [shape = 's32[1]{0}', space=sflag, size = 0x4, scoped, tag = 'scoped memory for tpu_custom_call.1']
    #allocation13 [shape = 'u8[16384]{0}', space=vmem, size = 0x4000, scoped, tag = 'input window, operand 15, single buffered']
    #allocation14 [shape = 'u8[16384]{0}', space=vmem, size = 0x4000, scoped, tag = 'input window, operand 16, single buffered']
    #allocation15 [shape = 's32[1]{0}', space=sflag, size = 0x4, scoped, tag = 'scoped memory for tpu_custom_call.1']
    #allocation16 [shape = 'u8[16384]{0}', space=vmem, size = 0x4000, scoped, tag = 'input window, operand 17, single buffered']
    #allocation17 [shape = 'u8[16384]{0}', space=vmem, size = 0x4000, scoped, tag = 'input window, operand 24, single buffered']
    #allocation18 [shape = 's32[1]{0}', space=sflag, size = 0x4, scoped, tag = 'scoped memory for tpu_custom_call.1']
    #allocation19 [shape = 'u8[8192]{0}', space=vmem, size = 0x2000, scoped, tag = 'output window, operand 0, single buffered']
    %66 = vsyncpa [#allocation3], 0
    %67 = vsyncpa [#allocation6], 0
    %68 = vsyncpa [#allocation9], 0
    %69 = vsyncpa [#allocation12], 0
    %70 = vsyncpa [#allocation15], 0
    %71 = vsyncpa [#allocation18], 0
    %72 = vsyncpa [#allocation4], 0
    // Predicated region
    $region2: #{tpu_custom_call.1} parent=1 // pred_check
      _
    $region3: #{tpu_custom_call.1} parent=1 // pred_check_branch
      %74 = sbr.rel (0) target = $region5
    $region4: #{tpu_custom_call.1} parent=1 // pred_region
      %76 = vsyncadd [#allocation3], 0
      %s77 = sshll.u32 %s1, 4
      %s78 = int_to_ptr.hbm [resolvable:$true] %s77
      %s79 = sshll.u32 [#allocation2], 4
      %s80 = int_to_ptr.vmem [resolvable:$true] %s79
      %85 = dma.hbm_to_vmem [thread:$0]  %s78, 256, %s80, [#allocation3], 128, 128, 8
    $region5: #{tpu_custom_call.1} parent=1 // pred_fallthru
      _
    // Predicated region
    $region6: #{tpu_custom_call.1} parent=1 // pred_check
      _
    $region7: #{tpu_custom_call.1} parent=1 // pred_check_branch
      %87 = sbr.rel (0) target = $region9
    $region8: #{tpu_custom_call.1} parent=1 // pred_region
      %89 = vsyncadd [#allocation6], 0
      %s90 = sshll.u32 %s3, 4
      %s91 = int_to_ptr.hbm [resolvable:$true] %s90
      %s92 = sshll.u32 [#allocation5], 4
      %s93 = int_to_ptr.vmem [resolvable:$true] %s92
      %98 = dma.hbm_to_vmem [thread:$0]  %s91, 256, %s93, [#allocation6], 128, 128, 8
    $region9: #{tpu_custom_call.1} parent=1 // pred_fallthru
      _
    // Predicated region
    $region10: #{tpu_custom_call.1} parent=1 // pred_check
      _
    $region11: #{tpu_custom_call.1} parent=1 // pred_check_branch
      %100 = sbr.rel (0) target = $region13
    $region12: #{tpu_custom_call.1} parent=1 // pred_region
      %102 = vsyncadd [#allocation6], 0
      %s103 = sshll.u32 %s5, 4
      %s104 = int_to_ptr.hbm [resolvable:$true] %s103
      %s105 = sshll.u32 [#allocation7], 4
      %s106 = int_to_ptr.vmem [resolvable:$true] %s105
      %111 = dma.hbm_to_vmem [thread:$0]  %s104, 256, %s106, [#allocation6], 128, 128, 8
    $region13: #{tpu_custom_call.1} parent=1 // pred_fallthru
      _
    // Predicated region
    $region14: #{tpu_custom_call.1} parent=1 // pred_check
      _
    $region15: #{tpu_custom_call.1} parent=1 // pred_check_branch
      %113 = sbr.rel (0) target = $region17
    $region16: #{tpu_custom_call.1} parent=1 // pred_region
      %115 = vsyncadd [#allocation9], 0
      %s116 = sshll.u32 %s7, 4
      %s117 = int_to_ptr.hbm [resolvable:$true] %s116
      %s118 = sshll.u32 [#allocation8], 4
      %s119 = int_to_ptr.vmem [resolvable:$true] %s118
      %124 = dma.hbm_to_vmem [thread:$0]  %s117, 256, %s119, [#allocation9], 128, 128, 8
    $region17: #{tpu_custom_call.1} parent=1 // pred_fallthru
      _
    // Predicated region
    $region18: #{tpu_custom_call.1} parent=1 // pred_check
      _
    $region19: #{tpu_custom_call.1} parent=1 // pred_check_branch
      %126 = sbr.rel (0) target = $region21
    $region20: #{tpu_custom_call.1} parent=1 // pred_region
      _
    $region21: #{tpu_custom_call.1} parent=1 // pred_fallthru
      _
    // Predicated region
    $region22: #{tpu_custom_call.1} parent=1 // pred_check
      _
    $region23: #{tpu_custom_call.1} parent=1 // pred_check_branch
      %128 = sbr.rel (0) target = $region25
    $region24: #{tpu_custom_call.1} parent=1 // pred_region
      _
    $region25: #{tpu_custom_call.1} parent=1 // pred_fallthru
      _
    // Predicated region
    $region26: #{tpu_custom_call.1} parent=1 // pred_check
      _
    $region27: #{tpu_custom_call.1} parent=1 // pred_check_branch
      %130 = sbr.rel (0) target = $region29
    $region28: #{tpu_custom_call.1} parent=1 // pred_region
      _
    $region29: #{tpu_custom_call.1} parent=1 // pred_fallthru
      _
    // Predicated region
    $region30: #{tpu_custom_call.1} parent=1 // pred_check
      _
    $region31: #{tpu_custom_call.1} parent=1 // pred_check_branch
      %132 = sbr.rel (0) target = $region33
    $region32: #{tpu_custom_call.1} parent=1 // pred_region
      %134 = vsyncadd [#allocation9], 0
      %s135 = sshll.u32 %s15, 4
      %s136 = int_to_ptr.hbm [resolvable:$true] %s135
      %s137 = sshll.u32 [#allocation10], 4
      %s138 = int_to_ptr.vmem [resolvable:$true] %s137
      %143 = dma.hbm_to_vmem [thread:$0]  %s136, 512, %s138, [#allocation9], 128, 128, 8
    $region33: #{tpu_custom_call.1} parent=1 // pred_fallthru
      _
    // Predicated region
    $region34: #{tpu_custom_call.1} parent=1 // pred_check
      _
    $region35: #{tpu_custom_call.1} parent=1 // pred_check_branch
      %145 = sbr.rel (0) target = $region37
    $region36: #{tpu_custom_call.1} parent=1 // pred_region
      _
    $region37: #{tpu_custom_call.1} parent=1 // pred_fallthru
      _
    // Predicated region
    $region38: #{tpu_custom_call.1} parent=1 // pred_check
      _
    $region39: #{tpu_custom_call.1} parent=1 // pred_check_branch
      %147 = sbr.rel (0) target = $region41
    $region40: #{tpu_custom_call.1} parent=1 // pred_region
      _
    $region41: #{tpu_custom_call.1} parent=1 // pred_fallthru
      _
    // Predicated region
    $region42: #{tpu_custom_call.1} parent=1 // pred_check
      _
    $region43: #{tpu_custom_call.1} parent=1 // pred_check_branch
      %149 = sbr.rel (0) target = $region45
    $region44: #{tpu_custom_call.1} parent=1 // pred_region
      _
    $region45: #{tpu_custom_call.1} parent=1 // pred_fallthru
      _
    // Predicated region
    $region46: #{tpu_custom_call.1} parent=1 // pred_check
      _
    $region47: #{tpu_custom_call.1} parent=1 // pred_check_branch
      %151 = sbr.rel (0) target = $region49
    $region48: #{tpu_custom_call.1} parent=1 // pred_region
      _
    $region49: #{tpu_custom_call.1} parent=1 // pred_fallthru
      _
    // Predicated region
    $region50: #{tpu_custom_call.1} parent=1 // pred_check
      _
    $region51: #{tpu_custom_call.1} parent=1 // pred_check_branch
      %153 = sbr.rel (0) target = $region53
    $region52: #{tpu_custom_call.1} parent=1 // pred_region
      _
    $region53: #{tpu_custom_call.1} parent=1 // pred_fallthru
      _
    // Predicated region
    $region54: #{tpu_custom_call.1} parent=1 // pred_check
      _
    $region55: #{tpu_custom_call.1} parent=1 // pred_check_branch
      %155 = sbr.rel (0) target = $region57
    $region56: #{tpu_custom_call.1} parent=1 // pred_region
      _
    $region57: #{tpu_custom_call.1} parent=1 // pred_fallthru
      _
    // Predicated region
    $region58: #{tpu_custom_call.1} parent=1 // pred_check
      _
    $region59: #{tpu_custom_call.1} parent=1 // pred_check_branch
      %157 = sbr.rel (0) target = $region61
    $region60: #{tpu_custom_call.1} parent=1 // pred_region
      %159 = vsyncadd [#allocation12], 0
      %s160 = sshll.u32 %s29, 4
      %s161 = int_to_ptr.hbm [resolvable:$true] %s160
      %s162 = sshll.u32 [#allocation11], 4
      %s163 = int_to_ptr.vmem [resolvable:$true] %s162
      %168 = dma.hbm_to_vmem [thread:$0]  %s161, 512, %s163, [#allocation12], 128, 128, 8
    $region61: #{tpu_custom_call.1} parent=1 // pred_fallthru
      _
    // Predicated region
    $region62: #{tpu_custom_call.1} parent=1 // pred_check
      _
    $region63: #{tpu_custom_call.1} parent=1 // pred_check_branch
      %170 = sbr.rel (0) target = $region65
    $region64: #{tpu_custom_call.1} parent=1 // pred_region
      %172 = vsyncadd [#allocation12], 0
      %s173 = sshll.u32 %s31, 4
      %s174 = int_to_ptr.hbm [resolvable:$true] %s173
      %s175 = sshll.u32 [#allocation13], 4
      %s176 = int_to_ptr.vmem [resolvable:$true] %s175
      %181 = dma.hbm_to_vmem [thread:$0]  %s174, 512, %s176, [#allocation12], 128, 128, 8
    $region65: #{tpu_custom_call.1} parent=1 // pred_fallthru
      _
    // Predicated region
    $region66: #{tpu_custom_call.1} parent=1 // pred_check
      _
    $region67: #{tpu_custom_call.1} parent=1 // pred_check_branch
      %183 = sbr.rel (0) target = $region69
    $region68: #{tpu_custom_call.1} parent=1 // pred_region
      %185 = vsyncadd [#allocation15], 0
      %s186 = sshll.u32 %s33, 4
      %s187 = int_to_ptr.hbm [resolvable:$true] %s186
      %s188 = sshll.u32 [#allocation14], 4
      %s189 = int_to_ptr.vmem [resolvable:$true] %s188
      %194 = dma.hbm_to_vmem [thread:$0]  %s187, 512, %s189, [#allocation15], 128, 128, 8
    $region69: #{tpu_custom_call.1} parent=1 // pred_fallthru
      _
    // Predicated region
    $region70: #{tpu_custom_call.1} parent=1 // pred_check
      _
    $region71: #{tpu_custom_call.1} parent=1 // pred_check_branch
      %196 = sbr.rel (0) target = $region73
    $region72: #{tpu_custom_call.1} parent=1 // pred_region
      %198 = vsyncadd [#allocation15], 0
      %s199 = sshll.u32 %s35, 4
      %s200 = int_to_ptr.hbm [resolvable:$true] %s199
      %s201 = sshll.u32 [#allocation16], 4
      %s202 = int_to_ptr.vmem [resolvable:$true] %s201
      %207 = dma.hbm_to_vmem [thread:$0]  %s200, 512, %s202, [#allocation15], 128, 128, 8
    $region73: #{tpu_custom_call.1} parent=1 // pred_fallthru
      _
    // Predicated region
    $region74: #{tpu_custom_call.1} parent=1 // pred_check
      _
    $region75: #{tpu_custom_call.1} parent=1 // pred_check_branch
      %209 = sbr.rel (0) target = $region77
    $region76: #{tpu_custom_call.1} parent=1 // pred_region
      _
    $region77: #{tpu_custom_call.1} parent=1 // pred_fallthru
      _
    // Predicated region
    $region78: #{tpu_custom_call.1} parent=1 // pred_check
      _
    $region79: #{tpu_custom_call.1} parent=1 // pred_check_branch
      %211 = sbr.rel (0) target = $region81
    $region80: #{tpu_custom_call.1} parent=1 // pred_region
      _
    $region81: #{tpu_custom_call.1} parent=1 // pred_fallthru
      _
    // Predicated region
    $region82: #{tpu_custom_call.1} parent=1 // pred_check
      _
    $region83: #{tpu_custom_call.1} parent=1 // pred_check_branch
      %213 = sbr.rel (0) target = $region85
    $region84: #{tpu_custom_call.1} parent=1 // pred_region
      _
    $region85: #{tpu_custom_call.1} parent=1 // pred_fallthru
      _
    // Predicated region
    $region86: #{tpu_custom_call.1} parent=1 // pred_check
      _
    $region87: #{tpu_custom_call.1} parent=1 // pred_check_branch
      %215 = sbr.rel (0) target = $region89
    $region88: #{tpu_custom_call.1} parent=1 // pred_region
      _
    $region89: #{tpu_custom_call.1} parent=1 // pred_fallthru
      _
    // Predicated region
    $region90: #{tpu_custom_call.1} parent=1 // pred_check
      _
    $region91: #{tpu_custom_call.1} parent=1 // pred_check_branch
      %217 = sbr.rel (0) target = $region93
    $region92: #{tpu_custom_call.1} parent=1 // pred_region
      _
    $region93: #{tpu_custom_call.1} parent=1 // pred_fallthru
      _
    // Predicated region
    $region94: #{tpu_custom_call.1} parent=1 // pred_check
      _
    $region95: #{tpu_custom_call.1} parent=1 // pred_check_branch
      %219 = sbr.rel (0) target = $region97
    $region96: #{tpu_custom_call.1} parent=1 // pred_region
      _
    $region97: #{tpu_custom_call.1} parent=1 // pred_fallthru
      _
    // Predicated region
    $region98: #{tpu_custom_call.1} parent=1 // pred_check
      _
    $region99: #{tpu_custom_call.1} parent=1 // pred_check_branch
      %221 = sbr.rel (0) target = $region101
    $region100: #{tpu_custom_call.1} parent=1 // pred_region
      %223 = vsyncadd [#allocation18], 0
      %s224 = sshll.u32 %s49, 4
      %s225 = int_to_ptr.hbm [resolvable:$true] %s224
      %s226 = sshll.u32 [#allocation17], 4
      %s227 = int_to_ptr.vmem [resolvable:$true] %s226
      %232 = dma.hbm_to_vmem [thread:$0]  %s225, 512, %s227, [#allocation18], 128, 128, 8
    $region101: #{tpu_custom_call.1} parent=1 // pred_fallthru
      _
    // Predicated region
    $region102: #{tpu_custom_call.1} parent=1 // pred_check
      _
    $region103: #{tpu_custom_call.1} parent=1 // pred_check_branch
      %234 = sbr.rel (0) target = $region105
    $region104: #{tpu_custom_call.1} parent=1 // pred_region
      _
    $region105: #{tpu_custom_call.1} parent=1 // pred_fallthru
      _
    // Predicated region
    $region106: #{tpu_custom_call.1} parent=1 // pred_check
      _
    $region107: #{tpu_custom_call.1} parent=1 // pred_check_branch
      %236 = sbr.rel (0) target = $region109
    $region108: #{tpu_custom_call.1} parent=1 // pred_region
      _
    $region109: #{tpu_custom_call.1} parent=1 // pred_fallthru
      _
    // Predicated region
    $region110: #{tpu_custom_call.1} parent=1 // pred_check
      _
    $region111: #{tpu_custom_call.1} parent=1 // pred_check_branch
      %238 = sbr.rel (0) target = $region113
    $region112: #{tpu_custom_call.1} parent=1 // pred_region
      _
    $region113: #{tpu_custom_call.1} parent=1 // pred_fallthru
      _
    // Predicated region
    $region114: #{tpu_custom_call.1} parent=1 // pred_check
      _
    $region115: #{tpu_custom_call.1} parent=1 // pred_check_branch
      %240 = sbr.rel (0) target = $region117
    $region116: #{tpu_custom_call.1} parent=1 // pred_region
      _
    $region117: #{tpu_custom_call.1} parent=1 // pred_fallthru
      _
    // Predicated region
    $region118: #{tpu_custom_call.1} parent=1 // pred_check
      _
    $region119: #{tpu_custom_call.1} parent=1 // pred_check_branch
      %242 = sbr.rel (0) target = $region121
    $region120: #{tpu_custom_call.1} parent=1 // pred_region
      _
    $region121: #{tpu_custom_call.1} parent=1 // pred_fallthru
      _
    // Predicated region
    $region122: #{tpu_custom_call.1} parent=1 // pred_check
      _
    $region123: #{tpu_custom_call.1} parent=1 // pred_check_branch
      %244 = sbr.rel (0) target = $region125
    $region124: #{tpu_custom_call.1} parent=1 // pred_region
      %246 = dma.done [#allocation3], 256
    $region125: #{tpu_custom_call.1} parent=1 // pred_fallthru
      _
    // Predicated region
    $region126: #{tpu_custom_call.1} parent=1 // pred_check
      _
    $region127: #{tpu_custom_call.1} parent=1 // pred_check_branch
      %248 = sbr.rel (0) target = $region129
    $region128: #{tpu_custom_call.1} parent=1 // pred_region
      %250 = dma.done [#allocation6], 256
    $region129: #{tpu_custom_call.1} parent=1 // pred_fallthru
      _
    // Predicated region
    $region130: #{tpu_custom_call.1} parent=1 // pred_check
      _
    $region131: #{tpu_custom_call.1} parent=1 // pred_check_branch
      %252 = sbr.rel (0) target = $region133
    $region132: #{tpu_custom_call.1} parent=1 // pred_region
      %254 = dma.done [#allocation6], 256
    $region133: #{tpu_custom_call.1} parent=1 // pred_fallthru
      _
    // Predicated region
    $region134: #{tpu_custom_call.1} parent=1 // pred_check
      _
    $region135: #{tpu_custom_call.1} parent=1 // pred_check_branch
      %256 = sbr.rel (0) target = $region137
    $region136: #{tpu_custom_call.1} parent=1 // pred_region
      %258 = dma.done [#allocation9], 256
    $region137: #{tpu_custom_call.1} parent=1 // pred_fallthru
      _
    // Predicated region
    $region138: #{tpu_custom_call.1} parent=1 // pred_check
      _
    $region139: #{tpu_custom_call.1} parent=1 // pred_check_branch
      %260 = sbr.rel (0) target = $region141
    $region140: #{tpu_custom_call.1} parent=1 // pred_region
      %262 = dma.done [#allocation9], 512
    $region141: #{tpu_custom_call.1} parent=1 // pred_fallthru
      _
    // Predicated region
    $region142: #{tpu_custom_call.1} parent=1 // pred_check
      _
    $region143: #{tpu_custom_call.1} parent=1 // pred_check_branch
      %264 = sbr.rel (0) target = $region145
    $region144: #{tpu_custom_call.1} parent=1 // pred_region
      %266 = dma.done [#allocation12], 512
    $region145: #{tpu_custom_call.1} parent=1 // pred_fallthru
      _
    // Predicated region
    $region146: #{tpu_custom_call.1} parent=1 // pred_check
      _
    $region147: #{tpu_custom_call.1} parent=1 // pred_check_branch
      %268 = sbr.rel (0) target = $region149
    $region148: #{tpu_custom_call.1} parent=1 // pred_region
      %270 = dma.done [#allocation12], 512
    $region149: #{tpu_custom_call.1} parent=1 // pred_fallthru
      _
    // Predicated region
    $region150: #{tpu_custom_call.1} parent=1 // pred_check
      _
    $region151: #{tpu_custom_call.1} parent=1 // pred_check_branch
      %272 = sbr.rel (0) target = $region153
    $region152: #{tpu_custom_call.1} parent=1 // pred_region
      %274 = dma.done [#allocation15], 512
    $region153: #{tpu_custom_call.1} parent=1 // pred_fallthru
      _
    // Predicated region
    $region154: #{tpu_custom_call.1} parent=1 // pred_check
      _
    $region155: #{tpu_custom_call.1} parent=1 // pred_check_branch
      %276 = sbr.rel (0) target = $region157
    $region156: #{tpu_custom_call.1} parent=1 // pred_region
      %278 = dma.done [#allocation15], 512
    $region157: #{tpu_custom_call.1} parent=1 // pred_fallthru
      _
    // Predicated region
    $region158: #{tpu_custom_call.1} parent=1 // pred_check
      _
    $region159: #{tpu_custom_call.1} parent=1 // pred_check_branch
      %280 = sbr.rel (0) target = $region161
    $region160: #{tpu_custom_call.1} parent=1 // pred_region
      %282 = dma.done [#allocation18], 512
    $region161: #{tpu_custom_call.1} parent=1 // pred_fallthru
      _
    %v283 = vld [vmem:[#allocation2] sm:$0xff]
    %v284 = vld [vmem:[#allocation2 + $0x8] sm:$0xff]
    %v285 = vld [vmem:[#allocation5] sm:$0xff]
    %v286 = vld [vmem:[#allocation5 + $0x8] sm:$0xff]
    %v287 = vld [vmem:[#allocation7] sm:$0xff]
    %v288 = vld [vmem:[#allocation7 + $0x8] sm:$0xff]
    %v289 = vld [vmem:[#allocation8] sm:$0xff]
    %v290 = vld [vmem:[#allocation8 + $0x8] sm:$0xff]
    %v291 = vadd.f32 %v283, %v287
    %v292 = vadd.f32 %v284, %v288
    %v293 = vld [vmem:[%s9] sm:$0xff]
    %v294 = vld [vmem:[%s9 + $0x8] sm:$0xff]
    %v295 = vld [vmem:[%s9 + $0x10] sm:$0xff]
    %v296 = vld [vmem:[%s9 + $0x18] sm:$0xff]
    %v297 = vld [vmem:[%s17] sm:$0x1]
    %v299 = vperm.slane %v297, 0
    %vm301 = vcmask 261120
    %v303 = vsel %vm301, %v291, 0
    %v306 = vsel %vm301, %v292, 0
    %308 = vmatpush.msra.mxu0 0.0
    %309 = vmatpush.msra.mxu0 0.0
    %310 = vmatpush.msra.mxu0 0.0
    %311 = vmatpush.msra.mxu0 0.0
    %312 = vmatpush.msra.mxu0 0.0
    %313 = vmatpush.msra.mxu0 0.0
    %314 = vmatpush.msra.mxu0 0.0
    %315 = vmatpush.msra.mxu0 0.0
    %316 = vmatpush.msra.mxu0 0.0
    %317 = vmatpush.msra.mxu0 0.0
    %318 = vmatpush.msra.mxu0 0.0
    %319 = vmatpush.msra.mxu0 0.0
    %320 = vmatpush.msra.mxu0 %v296
    %321 = vmatpush.msra.mxu0 %v295
    %322 = vmatpush.msra.mxu0 %v294
    %323 = vmatpush.msra.mxu0 %v293
    %324 = vmatmul.f32.gmra.mxu0 %v303
    %v325 = vpop.f32.mrf.mxu0
    %v326 = vadd.f32 %v299, %v325
    %327 = vmatmul.f32.gmra.mxu0 %v306
    %v328 = vpop.f32.mrf.mxu0
    %v329 = vadd.f32 %v299, %v328
    %330 = vdwg.mxu0
    %v331 = vld [vmem:[%s11] sm:$0xff]
    %v332 = vld [vmem:[%s11 + $0x8] sm:$0xff]
    %v333 = vld [vmem:[%s11 + $0x10] sm:$0xff]
    %v334 = vld [vmem:[%s11 + $0x18] sm:$0xff]
    %v335 = vld [vmem:[%s19] sm:$0x1]
    %v337 = vperm.slane %v335, 0
    %339 = vmatpush.msra.mxu0 0.0
    %340 = vmatpush.msra.mxu0 0.0
    %341 = vmatpush.msra.mxu0 0.0
    %342 = vmatpush.msra.mxu0 0.0
    %343 = vmatpush.msra.mxu0 0.0
    %344 = vmatpush.msra.mxu0 0.0
    %345 = vmatpush.msra.mxu0 0.0
    %346 = vmatpush.msra.mxu0 0.0
    %347 = vmatpush.msra.mxu0 0.0
    %348 = vmatpush.msra.mxu0 0.0
    %349 = vmatpush.msra.mxu0 0.0
    %350 = vmatpush.msra.mxu0 0.0
    %351 = vmatpush.msra.mxu0 %v334
    %352 = vmatpush.msra.mxu0 %v333
    %353 = vmatpush.msra.mxu0 %v332
    %354 = vmatpush.msra.mxu0 %v331
    %355 = vmatmul.f32.gmra.mxu0 %v303
    %v356 = vpop.f32.mrf.mxu0
    %v357 = vadd.f32 %v337, %v356
    %358 = vmatmul.f32.gmra.mxu0 %v306
    %v359 = vpop.f32.mrf.mxu0
    %v360 = vadd.f32 %v337, %v359
    %361 = vdwg.mxu0
    %v362 = vld [vmem:[%s13] sm:$0xff]
    %v363 = vld [vmem:[%s13 + $0x8] sm:$0xff]
    %v364 = vld [vmem:[%s13 + $0x10] sm:$0xff]
    %v365 = vld [vmem:[%s13 + $0x18] sm:$0xff]
    %v366 = vld [vmem:[%s21] sm:$0x1]
    %v368 = vperm.slane %v366, 0
    %v371 = vsel %vm301, %v283, 0
    %v374 = vsel %vm301, %v284, 0
    %376 = vmatpush.msra.mxu0 0.0
    %377 = vmatpush.msra.mxu0 0.0
    %378 = vmatpush.msra.mxu0 0.0
    %379 = vmatpush.msra.mxu0 0.0
    %380 = vmatpush.msra.mxu0 0.0
    %381 = vmatpush.msra.mxu0 0.0
    %382 = vmatpush.msra.mxu0 0.0
    %383 = vmatpush.msra.mxu0 0.0
    %384 = vmatpush.msra.mxu0 0.0
    %385 = vmatpush.msra.mxu0 0.0
    %386 = vmatpush.msra.mxu0 0.0
    %387 = vmatpush.msra.mxu0 0.0
    %388 = vmatpush.msra.mxu0 %v365
    %389 = vmatpush.msra.mxu0 %v364
    %390 = vmatpush.msra.mxu0 %v363
    %391 = vmatpush.msra.mxu0 %v362
    %392 = vmatmul.f32.gmra.mxu0 %v371
    %v393 = vpop.f32.mrf.mxu0
    %v394 = vadd.f32 %v368, %v393
    %395 = vmatmul.f32.gmra.mxu0 %v374
    %v396 = vpop.f32.mrf.mxu0
    %v397 = vadd.f32 %v368, %v396
    %398 = vdwg.mxu0
    %v399 = vmul.f32 %v326, 0.35355338
    %v400 = vmul.f32 %v329, 0.35355338
    %v401 = vld [vmem:[#allocation10] sm:$0xff]
    %v402 = vld [vmem:[#allocation10 + $0x8] sm:$0xff]
    %v403 = vld [vmem:[#allocation10 + $0x10] sm:$0xff]
    %v404 = vld [vmem:[#allocation10 + $0x18] sm:$0xff]
    %vm405 = vcmask 64512
    %v407 = vsel %vm405, %v399, 0
    %v410 = vsel %vm405, %v357, 0
    %412 = vmatpush.xpose.msra.mxu0 0.0
    %413 = vmatpush.xpose.msra.mxu0 0.0
    %414 = vmatpush.xpose.msra.mxu0 0.0
    %415 = vmatpush.xpose.msra.mxu0 0.0
    %416 = vmatpush.xpose.msra.mxu0 0.0
    %417 = vmatpush.xpose.msra.mxu0 0.0
    %418 = vmatpush.xpose.msra.mxu0 0.0
    %419 = vmatpush.xpose.msra.mxu0 0.0
    %420 = vmatpush.xpose.msra.mxu0 0.0
    %421 = vmatpush.xpose.msra.mxu0 0.0
    %422 = vmatpush.xpose.msra.mxu0 0.0
    %423 = vmatpush.xpose.msra.mxu0 0.0
    %424 = vmatpush.xpose.msra.mxu0 0.0
    %425 = vmatpush.xpose.msra.mxu0 0.0
    %426 = vmatpush.xpose.msra.mxu0 0.0
    %427 = vmatpush.xpose.msra.mxu0 %v410
    %428 = vmatmul.f32.gmra.mxu0 %v407
    %v429 = vpop.f32.mrf.mxu0
    %v430 = vadd.f32 0.0, %v429
    %431 = vdwg.mxu0
    %v433 = vsel %vm405, %v400, 0
    %v436 = vsel %vm405, %v360, 0
    %438 = vmatpush.xpose.msra.mxu0 0.0
    %439 = vmatpush.xpose.msra.mxu0 0.0
    %440 = vmatpush.xpose.msra.mxu0 0.0
    %441 = vmatpush.xpose.msra.mxu0 0.0
    %442 = vmatpush.xpose.msra.mxu0 0.0
    %443 = vmatpush.xpose.msra.mxu0 0.0
    %444 = vmatpush.xpose.msra.mxu0 0.0
    %445 = vmatpush.xpose.msra.mxu0 0.0
    %446 = vmatpush.xpose.msra.mxu0 0.0
    %447 = vmatpush.xpose.msra.mxu0 0.0
    %448 = vmatpush.xpose.msra.mxu0 0.0
    %449 = vmatpush.xpose.msra.mxu0 0.0
    %450 = vmatpush.xpose.msra.mxu0 0.0
    %451 = vmatpush.xpose.msra.mxu0 0.0
    %452 = vmatpush.xpose.msra.mxu0 0.0
    %453 = vmatpush.xpose.msra.mxu0 %v436
    %454 = vmatmul.f32.gmra.mxu0 %v433
    %v455 = vpop.f32.mrf.mxu0
    %v456 = vadd.f32 0.0, %v455
    %457 = vdwg.mxu0
    %v458 = vsel %vm405, %v430, -inf
    %459 = vmax.xlane.f32.xlu0 %v458
    %v460 = vpop.xlane.xlu0 %459
    %v461 = vsel %vm405, %v456, -inf
    %462 = vmax.xlane.f32.xlu0 %v461
    %v463 = vpop.xlane.xlu0 %462
    %v464 = vsub.f32 %v430, %v460
    %v465 = vsub.f32 %v456, %v463
    %v466 = vmul.f32 %v464, 1.442695
    %v467 = vpow.pop %v466
    %v468 = vmul.f32 %v465, 1.442695
    %v469 = vpow.pop %v468
    %v470 = vsel %vm405, %v467, 0.0
    %471 = vadd.xlane.f32.xlu0 %v470
    %v472 = vpop.xlane.xlu0 %471
    %v473 = vsel %vm405, %v469, 0.0
    %474 = vadd.xlane.f32.xlu0 %v473
    %v475 = vpop.xlane.xlu0 %474
    %v476 = vrcp.pop %v472
    %v477 = vrcp.pop %v475
    %v478 = vmul.f32 %v467, %v476
    %v479 = vmul.f32 %v469, %v477
    %v481 = vsel %vm405, %v478, 0
    %483 = vmatpush.msra.mxu0 0.0
    %484 = vmatpush.msra.mxu0 0.0
    %485 = vmatpush.msra.mxu0 0.0
    %486 = vmatpush.msra.mxu0 0.0
    %487 = vmatpush.msra.mxu0 0.0
    %488 = vmatpush.msra.mxu0 0.0
    %489 = vmatpush.msra.mxu0 0.0
    %490 = vmatpush.msra.mxu0 0.0
    %491 = vmatpush.msra.mxu0 0.0
    %492 = vmatpush.msra.mxu0 0.0
    %493 = vmatpush.msra.mxu0 0.0
    %494 = vmatpush.msra.mxu0 0.0
    %495 = vmatpush.msra.mxu0 0.0
    %496 = vmatpush.msra.mxu0 0.0
    %497 = vmatpush.msra.mxu0 0.0
    %498 = vmatpush.msra.mxu0 %v394
    %499 = vmatmul.f32.gmra.mxu0 %v481
    %v500 = vpop.f32.mrf.mxu0
    %v501 = vadd.f32 0.0, %v500
    %502 = vdwg.mxu0
    %v504 = vsel %vm405, %v479, 0
    %506 = vmatpush.msra.mxu0 0.0
    %507 = vmatpush.msra.mxu0 0.0
    %508 = vmatpush.msra.mxu0 0.0
    %509 = vmatpush.msra.mxu0 0.0
    %510 = vmatpush.msra.mxu0 0.0
    %511 = vmatpush.msra.mxu0 0.0
    %512 = vmatpush.msra.mxu0 0.0
    %513 = vmatpush.msra.mxu0 0.0
    %514 = vmatpush.msra.mxu0 0.0
    %515 = vmatpush.msra.mxu0 0.0
    %516 = vmatpush.msra.mxu0 0.0
    %517 = vmatpush.msra.mxu0 0.0
    %518 = vmatpush.msra.mxu0 0.0
    %519 = vmatpush.msra.mxu0 0.0
    %520 = vmatpush.msra.mxu0 0.0
    %521 = vmatpush.msra.mxu0 %v397
    %522 = vmatmul.f32.gmra.mxu0 %v504
    %v523 = vpop.f32.mrf.mxu0
    %v524 = vadd.f32 0.0, %v523
    %525 = vdwg.mxu0
    %526 = vrot.lane.b32.xlu0 %v399, 120
    %v527 = vpop.permute.xlu0 %526
    %528 = vrot.lane.b32.xlu0 %v357, 120
    %v529 = vpop.permute.xlu0 %528
    %v530 = vsel %vm405, %v527, 0
    %v532 = vsel %vm405, %v529, 0
    %534 = vmatpush.xpose.msra.mxu0 0.0
    %535 = vmatpush.xpose.msra.mxu0 0.0
    %536 = vmatpush.xpose.msra.mxu0 0.0
    %537 = vmatpush.xpose.msra.mxu0 0.0
    %538 = vmatpush.xpose.msra.mxu0 0.0
    %539 = vmatpush.xpose.msra.mxu0 0.0
    %540 = vmatpush.xpose.msra.mxu0 0.0
    %541 = vmatpush.xpose.msra.mxu0 0.0
    %542 = vmatpush.xpose.msra.mxu0 0.0
    %543 = vmatpush.xpose.msra.mxu0 0.0
    %544 = vmatpush.xpose.msra.mxu0 0.0
    %545 = vmatpush.xpose.msra.mxu0 0.0
    %546 = vmatpush.xpose.msra.mxu0 0.0
    %547 = vmatpush.xpose.msra.mxu0 0.0
    %548 = vmatpush.xpose.msra.mxu0 0.0
    %549 = vmatpush.xpose.msra.mxu0 %v532
    %550 = vmatmul.f32.gmra.mxu0 %v530
    %v551 = vpop.f32.mrf.mxu0
    %v552 = vadd.f32 0.0, %v551
    %553 = vdwg.mxu0
    %554 = vrot.lane.b32.xlu0 %v400, 120
    %v555 = vpop.permute.xlu0 %554
    %556 = vrot.lane.b32.xlu0 %v360, 120
    %v557 = vpop.permute.xlu0 %556
    %v558 = vsel %vm405, %v555, 0
    %v560 = vsel %vm405, %v557, 0
    %562 = vmatpush.xpose.msra.mxu0 0.0
    %563 = vmatpush.xpose.msra.mxu0 0.0
    %564 = vmatpush.xpose.msra.mxu0 0.0
    %565 = vmatpush.xpose.msra.mxu0 0.0
    %566 = vmatpush.xpose.msra.mxu0 0.0
    %567 = vmatpush.xpose.msra.mxu0 0.0
    %568 = vmatpush.xpose.msra.mxu0 0.0
    %569 = vmatpush.xpose.msra.mxu0 0.0
    %570 = vmatpush.xpose.msra.mxu0 0.0
    %571 = vmatpush.xpose.msra.mxu0 0.0
    %572 = vmatpush.xpose.msra.mxu0 0.0
    %573 = vmatpush.xpose.msra.mxu0 0.0
    %574 = vmatpush.xpose.msra.mxu0 0.0
    %575 = vmatpush.xpose.msra.mxu0 0.0
    %576 = vmatpush.xpose.msra.mxu0 0.0
    %577 = vmatpush.xpose.msra.mxu0 %v560
    %578 = vmatmul.f32.gmra.mxu0 %v558
    %v579 = vpop.f32.mrf.mxu0
    %v580 = vadd.f32 0.0, %v579
    %581 = vdwg.mxu0
    %v582 = vsel %vm405, %v552, -inf
    %583 = vmax.xlane.f32.xlu0 %v582
    %v584 = vpop.xlane.xlu0 %583
    %v585 = vsel %vm405, %v580, -inf
    %586 = vmax.xlane.f32.xlu0 %v585
    %v587 = vpop.xlane.xlu0 %586
    %v588 = vsub.f32 %v552, %v584
    %v589 = vsub.f32 %v580, %v587
    %v590 = vmul.f32 %v588, 1.442695
    %v591 = vpow.pop %v590
    %v592 = vmul.f32 %v589, 1.442695
    %v593 = vpow.pop %v592
    %v594 = vsel %vm405, %v591, 0.0
    %595 = vadd.xlane.f32.xlu0 %v594
    %v596 = vpop.xlane.xlu0 %595
    %v597 = vsel %vm405, %v593, 0.0
    %598 = vadd.xlane.f32.xlu0 %v597
    %v599 = vpop.xlane.xlu0 %598
    %v600 = vrcp.pop %v596
    %v601 = vrcp.pop %v599
    %v602 = vmul.f32 %v591, %v600
    %v603 = vmul.f32 %v593, %v601
    %605 = vrot.lane.b32.xlu0 %v394, 120
    %v606 = vpop.permute.xlu0 %605
    %v609 = vsel %vm405, %v602, 0
    %611 = vmatpush.msra.mxu0 0.0
    %612 = vmatpush.msra.mxu0 0.0
    %613 = vmatpush.msra.mxu0 0.0
    %614 = vmatpush.msra.mxu0 0.0
    %615 = vmatpush.msra.mxu0 0.0
    %616 = vmatpush.msra.mxu0 0.0
    %617 = vmatpush.msra.mxu0 0.0
    %618 = vmatpush.msra.mxu0 0.0
    %619 = vmatpush.msra.mxu0 0.0
    %620 = vmatpush.msra.mxu0 0.0
    %621 = vmatpush.msra.mxu0 0.0
    %622 = vmatpush.msra.mxu0 0.0
    %623 = vmatpush.msra.mxu0 0.0
    %624 = vmatpush.msra.mxu0 0.0
    %625 = vmatpush.msra.mxu0 0.0
    %626 = vmatpush.msra.mxu0 %v606
    %627 = vmatmul.f32.gmra.mxu0 %v609
    %v628 = vpop.f32.mrf.mxu0
    %v629 = vadd.f32 0.0, %v628
    %630 = vdwg.mxu0
    %632 = vrot.lane.b32.xlu0 %v397, 120
    %v633 = vpop.permute.xlu0 %632
    %v636 = vsel %vm405, %v603, 0
    %638 = vmatpush.msra.mxu0 0.0
    %639 = vmatpush.msra.mxu0 0.0
    %640 = vmatpush.msra.mxu0 0.0
    %641 = vmatpush.msra.mxu0 0.0
    %642 = vmatpush.msra.mxu0 0.0
    %643 = vmatpush.msra.mxu0 0.0
    %644 = vmatpush.msra.mxu0 0.0
    %645 = vmatpush.msra.mxu0 0.0
    %646 = vmatpush.msra.mxu0 0.0
    %647 = vmatpush.msra.mxu0 0.0
    %648 = vmatpush.msra.mxu0 0.0
    %649 = vmatpush.msra.mxu0 0.0
    %650 = vmatpush.msra.mxu0 0.0
    %651 = vmatpush.msra.mxu0 0.0
    %652 = vmatpush.msra.mxu0 0.0
    %653 = vmatpush.msra.mxu0 %v633
    %654 = vmatmul.f32.gmra.mxu0 %v636
    %v655 = vpop.f32.mrf.mxu0
    %v656 = vadd.f32 0.0, %v655
    %657 = vdwg.mxu0
    %v659 = vsel %vm405, %v629, 0
    %v662 = vsel %vm405, %v656, 0
    %664 = vmatpush.msra.mxu0 0.0
    %665 = vmatpush.msra.mxu0 0.0
    %666 = vmatpush.msra.mxu0 0.0
    %667 = vmatpush.msra.mxu0 0.0
    %668 = vmatpush.msra.mxu0 0.0
    %669 = vmatpush.msra.mxu0 0.0
    %670 = vmatpush.msra.mxu0 0.0
    %671 = vmatpush.msra.mxu0 0.0
    %672 = vmatpush.msra.mxu0 0.0
    %673 = vmatpush.msra.mxu0 0.0
    %674 = vmatpush.msra.mxu0 0.0
    %675 = vmatpush.msra.mxu0 0.0
    %676 = vmatpush.msra.mxu0 0.0
    %677 = vmatpush.msra.mxu0 0.0
    %678 = vmatpush.msra.mxu0 0.0
    %679 = vmatpush.msra.mxu0 %v402
    %680 = vmatmul.f32.gmra.mxu0 %v659
    %v681 = vpop.f32.mrf.mxu0
    %v682 = vadd.f32 0.0, %v681
    %683 = vmatmul.f32.gmra.mxu0 %v662
    %v684 = vpop.f32.mrf.mxu0
    %v685 = vadd.f32 0.0, %v684
    %686 = vdwg.mxu0
    %v688 = vsel %vm405, %v501, 0
    %v691 = vsel %vm405, %v524, 0
    %693 = vmatpush.msra.mxu0 0.0
    %694 = vmatpush.msra.mxu0 0.0
    %695 = vmatpush.msra.mxu0 0.0
    %696 = vmatpush.msra.mxu0 0.0
    %697 = vmatpush.msra.mxu0 0.0
    %698 = vmatpush.msra.mxu0 0.0
    %699 = vmatpush.msra.mxu0 0.0
    %700 = vmatpush.msra.mxu0 0.0
    %701 = vmatpush.msra.mxu0 0.0
    %702 = vmatpush.msra.mxu0 0.0
    %703 = vmatpush.msra.mxu0 0.0
    %704 = vmatpush.msra.mxu0 0.0
    %705 = vmatpush.msra.mxu0 0.0
    %706 = vmatpush.msra.mxu0 0.0
    %707 = vmatpush.msra.mxu0 0.0
    %708 = vmatpush.msra.mxu0 %v401
    %709 = vmatmul.f32.gmra.mxu0 %v688
    %v710 = vpop.f32.mrf.mxu0
    %v711 = vadd.f32 %v682, %v710
    %712 = vmatmul.f32.gmra.mxu0 %v691
    %v713 = vpop.f32.mrf.mxu0
    %v714 = vadd.f32 %v685, %v713
    %715 = vdwg.mxu0
    %716 = vrot.lane.b32.xlu0 %v399, 112
    %v717 = vpop.permute.xlu0 %716
    %718 = vrot.lane.b32.xlu0 %v357, 112
    %v719 = vpop.permute.xlu0 %718
    %v720 = vsel %vm405, %v717, 0
    %v722 = vsel %vm405, %v719, 0
    %724 = vmatpush.xpose.msra.mxu0 0.0
    %725 = vmatpush.xpose.msra.mxu0 0.0
    %726 = vmatpush.xpose.msra.mxu0 0.0
    %727 = vmatpush.xpose.msra.mxu0 0.0
    %728 = vmatpush.xpose.msra.mxu0 0.0
    %729 = vmatpush.xpose.msra.mxu0 0.0
    %730 = vmatpush.xpose.msra.mxu0 0.0
    %731 = vmatpush.xpose.msra.mxu0 0.0
    %732 = vmatpush.xpose.msra.mxu0 0.0
    %733 = vmatpush.xpose.msra.mxu0 0.0
    %734 = vmatpush.xpose.msra.mxu0 0.0
    %735 = vmatpush.xpose.msra.mxu0 0.0
    %736 = vmatpush.xpose.msra.mxu0 0.0
    %737 = vmatpush.xpose.msra.mxu0 0.0
    %738 = vmatpush.xpose.msra.mxu0 0.0
    %739 = vmatpush.xpose.msra.mxu0 %v722
    %740 = vmatmul.f32.gmra.mxu0 %v720
    %v741 = vpop.f32.mrf.mxu0
    %v742 = vadd.f32 0.0, %v741
    %743 = vdwg.mxu0
    %744 = vrot.lane.b32.xlu0 %v400, 112
    %v745 = vpop.permute.xlu0 %744
    %746 = vrot.lane.b32.xlu0 %v360, 112
    %v747 = vpop.permute.xlu0 %746
    %v748 = vsel %vm405, %v745, 0
    %v750 = vsel %vm405, %v747, 0
    %752 = vmatpush.xpose.msra.mxu0 0.0
    %753 = vmatpush.xpose.msra.mxu0 0.0
    %754 = vmatpush.xpose.msra.mxu0 0.0
    %755 = vmatpush.xpose.msra.mxu0 0.0
    %756 = vmatpush.xpose.msra.mxu0 0.0
    %757 = vmatpush.xpose.msra.mxu0 0.0
    %758 = vmatpush.xpose.msra.mxu0 0.0
    %759 = vmatpush.xpose.msra.mxu0 0.0
    %760 = vmatpush.xpose.msra.mxu0 0.0
    %761 = vmatpush.xpose.msra.mxu0 0.0
    %762 = vmatpush.xpose.msra.mxu0 0.0
    %763 = vmatpush.xpose.msra.mxu0 0.0
    %764 = vmatpush.xpose.msra.mxu0 0.0
    %765 = vmatpush.xpose.msra.mxu0 0.0
    %766 = vmatpush.xpose.msra.mxu0 0.0
    %767 = vmatpush.xpose.msra.mxu0 %v750
    %768 = vmatmul.f32.gmra.mxu0 %v748
    %v769 = vpop.f32.mrf.mxu0
    %v770 = vadd.f32 0.0, %v769
    %771 = vdwg.mxu0
    %v772 = vsel %vm405, %v742, -inf
    %773 = vmax.xlane.f32.xlu0 %v772
    %v774 = vpop.xlane.xlu0 %773
    %v775 = vsel %vm405, %v770, -inf
    %776 = vmax.xlane.f32.xlu0 %v775
    %v777 = vpop.xlane.xlu0 %776
    %v778 = vsub.f32 %v742, %v774
    %v779 = vsub.f32 %v770, %v777
    %v780 = vmul.f32 %v778, 1.442695
    %v781 = vpow.pop %v780
    %v782 = vmul.f32 %v779, 1.442695
    %v783 = vpow.pop %v782
    %v784 = vsel %vm405, %v781, 0.0
    %785 = vadd.xlane.f32.xlu0 %v784
    %v786 = vpop.xlane.xlu0 %785
    %v787 = vsel %vm405, %v783, 0.0
    %788 = vadd.xlane.f32.xlu0 %v787
    %v789 = vpop.xlane.xlu0 %788
    %v790 = vrcp.pop %v786
    %v791 = vrcp.pop %v789
    %v792 = vmul.f32 %v781, %v790
    %v793 = vmul.f32 %v783, %v791
    %794 = vrot.lane.b32.xlu0 %v394, 112
    %v795 = vpop.permute.xlu0 %794
    %v798 = vsel %vm405, %v792, 0
    %800 = vmatpush.msra.mxu0 0.0
    %801 = vmatpush.msra.mxu0 0.0
    %802 = vmatpush.msra.mxu0 0.0
    %803 = vmatpush.msra.mxu0 0.0
    %804 = vmatpush.msra.mxu0 0.0
    %805 = vmatpush.msra.mxu0 0.0
    %806 = vmatpush.msra.mxu0 0.0
    %807 = vmatpush.msra.mxu0 0.0
    %808 = vmatpush.msra.mxu0 0.0
    %809 = vmatpush.msra.mxu0 0.0
    %810 = vmatpush.msra.mxu0 0.0
    %811 = vmatpush.msra.mxu0 0.0
    %812 = vmatpush.msra.mxu0 0.0
    %813 = vmatpush.msra.mxu0 0.0
    %814 = vmatpush.msra.mxu0 0.0
    %815 = vmatpush.msra.mxu0 %v795
    %816 = vmatmul.f32.gmra.mxu0 %v798
    %v817 = vpop.f32.mrf.mxu0
    %v818 = vadd.f32 0.0, %v817
    %819 = vdwg.mxu0
    %820 = vrot.lane.b32.xlu0 %v397, 112
    %v821 = vpop.permute.xlu0 %820
    %v824 = vsel %vm405, %v793, 0
    %826 = vmatpush.msra.mxu0 0.0
    %827 = vmatpush.msra.mxu0 0.0
    %828 = vmatpush.msra.mxu0 0.0
    %829 = vmatpush.msra.mxu0 0.0
    %830 = vmatpush.msra.mxu0 0.0
    %831 = vmatpush.msra.mxu0 0.0
    %832 = vmatpush.msra.mxu0 0.0
    %833 = vmatpush.msra.mxu0 0.0
    %834 = vmatpush.msra.mxu0 0.0
    %835 = vmatpush.msra.mxu0 0.0
    %836 = vmatpush.msra.mxu0 0.0
    %837 = vmatpush.msra.mxu0 0.0
    %838 = vmatpush.msra.mxu0 0.0
    %839 = vmatpush.msra.mxu0 0.0
    %840 = vmatpush.msra.mxu0 0.0
    %841 = vmatpush.msra.mxu0 %v821
    %842 = vmatmul.f32.gmra.mxu0 %v824
    %v843 = vpop.f32.mrf.mxu0
    %v844 = vadd.f32 0.0, %v843
    %845 = vdwg.mxu0
    %v847 = vsel %vm405, %v818, 0
    %v850 = vsel %vm405, %v844, 0
    %852 = vmatpush.msra.mxu0 0.0
    %853 = vmatpush.msra.mxu0 0.0
    %854 = vmatpush.msra.mxu0 0.0
    %855 = vmatpush.msra.mxu0 0.0
    %856 = vmatpush.msra.mxu0 0.0
    %857 = vmatpush.msra.mxu0 0.0
    %858 = vmatpush.msra.mxu0 0.0
    %859 = vmatpush.msra.mxu0 0.0
    %860 = vmatpush.msra.mxu0 0.0
    %861 = vmatpush.msra.mxu0 0.0
    %862 = vmatpush.msra.mxu0 0.0
    %863 = vmatpush.msra.mxu0 0.0
    %864 = vmatpush.msra.mxu0 0.0
    %865 = vmatpush.msra.mxu0 0.0
    %866 = vmatpush.msra.mxu0 0.0
    %867 = vmatpush.msra.mxu0 %v403
    %868 = vmatmul.f32.gmra.mxu0 %v847
    %v869 = vpop.f32.mrf.mxu0
    %v870 = vadd.f32 0.0, %v869
    %871 = vmatmul.f32.gmra.mxu0 %v850
    %v872 = vpop.f32.mrf.mxu0
    %v873 = vadd.f32 0.0, %v872
    %874 = vdwg.mxu0
    %v875 = vadd.f32 %v711, %v870
    %v876 = vadd.f32 %v714, %v873
    %877 = vrot.lane.b32.xlu0 %v399, 104
    %v878 = vpop.permute.xlu0 %877
    %879 = vrot.lane.b32.xlu0 %v357, 104
    %v880 = vpop.permute.xlu0 %879
    %v881 = vsel %vm405, %v878, 0
    %v883 = vsel %vm405, %v880, 0
    %885 = vmatpush.xpose.msra.mxu0 0.0
    %886 = vmatpush.xpose.msra.mxu0 0.0
    %887 = vmatpush.xpose.msra.mxu0 0.0
    %888 = vmatpush.xpose.msra.mxu0 0.0
    %889 = vmatpush.xpose.msra.mxu0 0.0
    %890 = vmatpush.xpose.msra.mxu0 0.0
    %891 = vmatpush.xpose.msra.mxu0 0.0
    %892 = vmatpush.xpose.msra.mxu0 0.0
    %893 = vmatpush.xpose.msra.mxu0 0.0
    %894 = vmatpush.xpose.msra.mxu0 0.0
    %895 = vmatpush.xpose.msra.mxu0 0.0
    %896 = vmatpush.xpose.msra.mxu0 0.0
    %897 = vmatpush.xpose.msra.mxu0 0.0
    %898 = vmatpush.xpose.msra.mxu0 0.0
    %899 = vmatpush.xpose.msra.mxu0 0.0
    %900 = vmatpush.xpose.msra.mxu0 %v883
    %901 = vmatmul.f32.gmra.mxu0 %v881
    %v902 = vpop.f32.mrf.mxu0
    %v903 = vadd.f32 0.0, %v902
    %904 = vdwg.mxu0
    %905 = vrot.lane.b32.xlu0 %v400, 104
    %v906 = vpop.permute.xlu0 %905
    %907 = vrot.lane.b32.xlu0 %v360, 104
    %v908 = vpop.permute.xlu0 %907
    %v909 = vsel %vm405, %v906, 0
    %v911 = vsel %vm405, %v908, 0
    %913 = vmatpush.xpose.msra.mxu0 0.0
    %914 = vmatpush.xpose.msra.mxu0 0.0
    %915 = vmatpush.xpose.msra.mxu0 0.0
    %916 = vmatpush.xpose.msra.mxu0 0.0
    %917 = vmatpush.xpose.msra.mxu0 0.0
    %918 = vmatpush.xpose.msra.mxu0 0.0
    %919 = vmatpush.xpose.msra.mxu0 0.0
    %920 = vmatpush.xpose.msra.mxu0 0.0
    %921 = vmatpush.xpose.msra.mxu0 0.0
    %922 = vmatpush.xpose.msra.mxu0 0.0
    %923 = vmatpush.xpose.msra.mxu0 0.0
    %924 = vmatpush.xpose.msra.mxu0 0.0
    %925 = vmatpush.xpose.msra.mxu0 0.0
    %926 = vmatpush.xpose.msra.mxu0 0.0
    %927 = vmatpush.xpose.msra.mxu0 0.0
    %928 = vmatpush.xpose.msra.mxu0 %v911
    %929 = vmatmul.f32.gmra.mxu0 %v909
    %v930 = vpop.f32.mrf.mxu0
    %v931 = vadd.f32 0.0, %v930
    %932 = vdwg.mxu0
    %v933 = vsel %vm405, %v903, -inf
    %934 = vmax.xlane.f32.xlu0 %v933
    %v935 = vpop.xlane.xlu0 %934
    %v936 = vsel %vm405, %v931, -inf
    %937 = vmax.xlane.f32.xlu0 %v936
    %v938 = vpop.xlane.xlu0 %937
    %v939 = vsub.f32 %v903, %v935
    %v940 = vsub.f32 %v931, %v938
    %v941 = vmul.f32 %v939, 1.442695
    %v942 = vpow.pop %v941
    %v943 = vmul.f32 %v940, 1.442695
    %v944 = vpow.pop %v943
    %v945 = vsel %vm405, %v942, 0.0
    %946 = vadd.xlane.f32.xlu0 %v945
    %v947 = vpop.xlane.xlu0 %946
    %v948 = vsel %vm405, %v944, 0.0
    %949 = vadd.xlane.f32.xlu0 %v948
    %v950 = vpop.xlane.xlu0 %949
    %v951 = vrcp.pop %v947
    %v952 = vrcp.pop %v950
    %v953 = vmul.f32 %v942, %v951
    %v954 = vmul.f32 %v944, %v952
    %955 = vrot.lane.b32.xlu0 %v394, 104
    %v956 = vpop.permute.xlu0 %955
    %v959 = vsel %vm405, %v953, 0
    %961 = vmatpush.msra.mxu0 0.0
    %962 = vmatpush.msra.mxu0 0.0
    %963 = vmatpush.msra.mxu0 0.0
    %964 = vmatpush.msra.mxu0 0.0
    %965 = vmatpush.msra.mxu0 0.0
    %966 = vmatpush.msra.mxu0 0.0
    %967 = vmatpush.msra.mxu0 0.0
    %968 = vmatpush.msra.mxu0 0.0
    %969 = vmatpush.msra.mxu0 0.0
    %970 = vmatpush.msra.mxu0 0.0
    %971 = vmatpush.msra.mxu0 0.0
    %972 = vmatpush.msra.mxu0 0.0
    %973 = vmatpush.msra.mxu0 0.0
    %974 = vmatpush.msra.mxu0 0.0
    %975 = vmatpush.msra.mxu0 0.0
    %976 = vmatpush.msra.mxu0 %v956
    %977 = vmatmul.f32.gmra.mxu0 %v959
    %v978 = vpop.f32.mrf.mxu0
    %v979 = vadd.f32 0.0, %v978
    %980 = vdwg.mxu0
    %981 = vrot.lane.b32.xlu0 %v397, 104
    %v982 = vpop.permute.xlu0 %981
    %v985 = vsel %vm405, %v954, 0
    %987 = vmatpush.msra.mxu0 0.0
    %988 = vmatpush.msra.mxu0 0.0
    %989 = vmatpush.msra.mxu0 0.0
    %990 = vmatpush.msra.mxu0 0.0
    %991 = vmatpush.msra.mxu0 0.0
    %992 = vmatpush.msra.mxu0 0.0
    %993 = vmatpush.msra.mxu0 0.0
    %994 = vmatpush.msra.mxu0 0.0
    %995 = vmatpush.msra.mxu0 0.0
    %996 = vmatpush.msra.mxu0 0.0
    %997 = vmatpush.msra.mxu0 0.0
    %998 = vmatpush.msra.mxu0 0.0
    %999 = vmatpush.msra.mxu0 0.0
    %1000 = vmatpush.msra.mxu0 0.0
    %1001 = vmatpush.msra.mxu0 0.0
    %1002 = vmatpush.msra.mxu0 %v982
    %1003 = vmatmul.f32.gmra.mxu0 %v985
    %v1004 = vpop.f32.mrf.mxu0
    %v1005 = vadd.f32 0.0, %v1004
    %1006 = vdwg.mxu0
    %v1008 = vsel %vm405, %v979, 0
    %v1011 = vsel %vm405, %v1005, 0
    %1013 = vmatpush.msra.mxu0 0.0
    %1014 = vmatpush.msra.mxu0 0.0
    %1015 = vmatpush.msra.mxu0 0.0
    %1016 = vmatpush.msra.mxu0 0.0
    %1017 = vmatpush.msra.mxu0 0.0
    %1018 = vmatpush.msra.mxu0 0.0
    %1019 = vmatpush.msra.mxu0 0.0
    %1020 = vmatpush.msra.mxu0 0.0
    %1021 = vmatpush.msra.mxu0 0.0
    %1022 = vmatpush.msra.mxu0 0.0
    %1023 = vmatpush.msra.mxu0 0.0
    %1024 = vmatpush.msra.mxu0 0.0
    %1025 = vmatpush.msra.mxu0 0.0
    %1026 = vmatpush.msra.mxu0 0.0
    %1027 = vmatpush.msra.mxu0 0.0
    %1028 = vmatpush.msra.mxu0 %v404
    %1029 = vmatmul.f32.gmra.mxu0 %v1008
    %v1030 = vpop.f32.mrf.mxu0
    %v1031 = vadd.f32 0.0, %v1030
    %1032 = vmatmul.f32.gmra.mxu0 %v1011
    %v1033 = vpop.f32.mrf.mxu0
    %v1034 = vadd.f32 0.0, %v1033
    %1035 = vdwg.mxu0
    %v1036 = vadd.f32 %v875, %v1031
    %v1037 = vadd.f32 %v876, %v1034
    %v1038 = vld [vmem:[%s23] sm:$0x1]
    %v1040 = vperm.slane %v1038, 0
    %v1042 = vadd.f32 %v1036, %v1040
    %v1043 = vadd.f32 %v1037, %v1040
    %v1044 = vadd.f32 %v283, %v1042
    %v1045 = vadd.f32 %v284, %v1043
    %v1046 = vsel %vm301, %v1044, 0.0
    %1047 = vadd.xlane.f32.xlu0 %v1046
    %v1048 = vpop.xlane.xlu0 %1047
    %v1049 = vsel %vm301, %v1045, 0.0
    %1050 = vadd.xlane.f32.xlu0 %v1049
    %v1051 = vpop.xlane.xlu0 %1050
    %v1052 = vrcp.pop 32.0
    %v1053 = vmul.f32 32.0, %v1052
    %v1054 = vsub.f32 1.0, %v1053
    %v1055 = vmul.f32 %v1052, %v1054
    %v1056 = vadd.f32 %v1052, %v1055
    %vm1057 = vweird.f32 %v1052
    %v1058 = vsel %vm1057, %v1052, %v1056
    %v1059 = vmul.f32 %v1048, %v1058
    %v1060 = vmul.f32 %v1051, %v1058
    %v1061 = vsub.f32 %v1044, %v1059
    %v1062 = vsub.f32 %v1045, %v1060
    %v1063 = vmul.f32 %v1061, %v1061
    %v1064 = vmul.f32 %v1062, %v1062
    %v1065 = vsel %vm301, %v1063, 0.0
    %1066 = vadd.xlane.f32.xlu0 %v1065
    %v1067 = vpop.xlane.xlu0 %1066
    %v1068 = vsel %vm301, %v1064, 0.0
    %1069 = vadd.xlane.f32.xlu0 %v1068
    %v1070 = vpop.xlane.xlu0 %1069
    %v1071 = vmul.f32 %v1067, %v1058
    %v1072 = vmul.f32 %v1070, %v1058
    %v1073 = vadd.f32 %v1071, 1e-05
    %v1074 = vadd.f32 %v1072, 1e-05
    %v1075 = vrsqrt.pop %v1073
    %v1076 = vmul.f32 %v1075, %v1073
    %v1077 = vmul.f32 %v1076, %v1075
    %v1078 = vmul.f32 0.5, %v1077
    %v1079 = vsub.f32 1.5, %v1078
    %v1080 = vmul.f32 %v1075, %v1079
    %vm1081 = vweird.f32 %v1073
    %vm1082 = vweird.f32 %v1075
    %vm1083 = vmor %vm1081, %vm1082
    %v1084 = vsel %vm1083, %v1075, %v1080
    %v1085 = vrsqrt.pop %v1074
    %v1086 = vmul.f32 %v1085, %v1074
    %v1087 = vmul.f32 %v1086, %v1085
    %v1088 = vmul.f32 0.5, %v1087
    %v1089 = vsub.f32 1.5, %v1088
    %v1090 = vmul.f32 %v1085, %v1089
    %vm1091 = vweird.f32 %v1074
    %vm1092 = vweird.f32 %v1085
    %vm1093 = vmor %vm1091, %vm1092
    %v1094 = vsel %vm1093, %v1085, %v1090
    %v1095 = vmul.f32 %v1061, %v1084
    %v1096 = vmul.f32 %v1062, %v1094
    %v1097 = vld [vmem:[%s25] sm:$0x1]
    %v1099 = vperm.slane %v1097, 0
    %v1101 = vmul.f32 %v1095, %v1099
    %v1102 = vmul.f32 %v1096, %v1099
    %v1103 = vld [vmem:[%s27] sm:$0x1]
    %v1105 = vperm.slane %v1103, 0
    %v1107 = vadd.f32 %v1101, %v1105
    %v1108 = vadd.f32 %v1102, %v1105
    %v1109 = vadd.f32 %v1107, %v287
    %v1110 = vadd.f32 %v1108, %v288
    %v1111 = vadd.f32 %v285, %v289
    %v1112 = vadd.f32 %v286, %v290
    %v1113 = vld [vmem:[#allocation11] sm:$0xff]
    %v1114 = vld [vmem:[#allocation11 + $0x8] sm:$0xff]
    %v1115 = vld [vmem:[#allocation11 + $0x10] sm:$0xff]
    %v1116 = vld [vmem:[#allocation11 + $0x18] sm:$0xff]
    %v1117 = vld [vmem:[%s37] sm:$0x1]
    %v1119 = vperm.slane %v1117, 0
    %v1122 = vsel %vm301, %v1109, 0
    %v1125 = vsel %vm301, %v1110, 0
    %1127 = vmatpush.msra.mxu0 0.0
    %1128 = vmatpush.msra.mxu0 0.0
    %1129 = vmatpush.msra.mxu0 0.0
    %1130 = vmatpush.msra.mxu0 0.0
    %1131 = vmatpush.msra.mxu0 0.0
    %1132 = vmatpush.msra.mxu0 0.0
    %1133 = vmatpush.msra.mxu0 0.0
    %1134 = vmatpush.msra.mxu0 0.0
    %1135 = vmatpush.msra.mxu0 0.0
    %1136 = vmatpush.msra.mxu0 0.0
    %1137 = vmatpush.msra.mxu0 0.0
    %1138 = vmatpush.msra.mxu0 0.0
    %1139 = vmatpush.msra.mxu0 %v1116
    %1140 = vmatpush.msra.mxu0 %v1115
    %1141 = vmatpush.msra.mxu0 %v1114
    %1142 = vmatpush.msra.mxu0 %v1113
    %1143 = vmatmul.f32.gmra.mxu0 %v1122
    %v1144 = vpop.f32.mrf.mxu0
    %v1145 = vadd.f32 %v1119, %v1144
    %1146 = vmatmul.f32.gmra.mxu0 %v1125
    %v1147 = vpop.f32.mrf.mxu0
    %v1148 = vadd.f32 %v1119, %v1147
    %1149 = vdwg.mxu0
    %v1150 = vld [vmem:[#allocation13] sm:$0xff]
    %v1151 = vld [vmem:[#allocation13 + $0x8] sm:$0xff]
    %v1152 = vld [vmem:[#allocation13 + $0x10] sm:$0xff]
    %v1153 = vld [vmem:[#allocation13 + $0x18] sm:$0xff]
    %v1154 = vld [vmem:[%s39] sm:$0x1]
    %v1156 = vperm.slane %v1154, 0
    %v1159 = vsel %vm301, %v1111, 0
    %v1162 = vsel %vm301, %v1112, 0
    %1164 = vmatpush.msra.mxu0 0.0
    %1165 = vmatpush.msra.mxu0 0.0
    %1166 = vmatpush.msra.mxu0 0.0
    %1167 = vmatpush.msra.mxu0 0.0
    %1168 = vmatpush.msra.mxu0 0.0
    %1169 = vmatpush.msra.mxu0 0.0
    %1170 = vmatpush.msra.mxu0 0.0
    %1171 = vmatpush.msra.mxu0 0.0
    %1172 = vmatpush.msra.mxu0 0.0
    %1173 = vmatpush.msra.mxu0 0.0
    %1174 = vmatpush.msra.mxu0 0.0
    %1175 = vmatpush.msra.mxu0 0.0
    %1176 = vmatpush.msra.mxu0 %v1153
    %1177 = vmatpush.msra.mxu0 %v1152
    %1178 = vmatpush.msra.mxu0 %v1151
    %1179 = vmatpush.msra.mxu0 %v1150
    %1180 = vmatmul.f32.gmra.mxu0 %v1159
    %v1181 = vpop.f32.mrf.mxu0
    %v1182 = vadd.f32 %v1156, %v1181
    %1183 = vmatmul.f32.gmra.mxu0 %v1162
    %v1184 = vpop.f32.mrf.mxu0
    %v1185 = vadd.f32 %v1156, %v1184
    %1186 = vdwg.mxu0
    %v1187 = vld [vmem:[#allocation14] sm:$0xff]
    %v1188 = vld [vmem:[#allocation14 + $0x8] sm:$0xff]
    %v1189 = vld [vmem:[#allocation14 + $0x10] sm:$0xff]
    %v1190 = vld [vmem:[#allocation14 + $0x18] sm:$0xff]
    %v1191 = vld [vmem:[%s41] sm:$0x1]
    %v1193 = vperm.slane %v1191, 0
    %v1196 = vsel %vm301, %v285, 0
    %v1199 = vsel %vm301, %v286, 0
    %1201 = vmatpush.msra.mxu0 0.0
    %1202 = vmatpush.msra.mxu0 0.0
    %1203 = vmatpush.msra.mxu0 0.0
    %1204 = vmatpush.msra.mxu0 0.0
    %1205 = vmatpush.msra.mxu0 0.0
    %1206 = vmatpush.msra.mxu0 0.0
    %1207 = vmatpush.msra.mxu0 0.0
    %1208 = vmatpush.msra.mxu0 0.0
    %1209 = vmatpush.msra.mxu0 0.0
    %1210 = vmatpush.msra.mxu0 0.0
    %1211 = vmatpush.msra.mxu0 0.0
    %1212 = vmatpush.msra.mxu0 0.0
    %1213 = vmatpush.msra.mxu0 %v1190
    %1214 = vmatpush.msra.mxu0 %v1189
    %1215 = vmatpush.msra.mxu0 %v1188
    %1216 = vmatpush.msra.mxu0 %v1187
    %1217 = vmatmul.f32.gmra.mxu0 %v1196
    %v1218 = vpop.f32.mrf.mxu0
    %v1219 = vadd.f32 %v1193, %v1218
    %1220 = vmatmul.f32.gmra.mxu0 %v1199
    %v1221 = vpop.f32.mrf.mxu0
    %v1222 = vadd.f32 %v1193, %v1221
    %1223 = vdwg.mxu0
    %v1224 = vmul.f32 %v1145, 0.35355338
    %v1225 = vmul.f32 %v1148, 0.35355338
    %v1226 = vld [vmem:[#allocation16] sm:$0xff]
    %v1227 = vld [vmem:[#allocation16 + $0x8] sm:$0xff]
    %v1228 = vld [vmem:[#allocation16 + $0x10] sm:$0xff]
    %v1229 = vld [vmem:[#allocation16 + $0x18] sm:$0xff]
    %v1231 = vsel %vm405, %v1224, 0
    %v1234 = vsel %vm405, %v1182, 0
    %1236 = vmatpush.xpose.msra.mxu0 0.0
    %1237 = vmatpush.xpose.msra.mxu0 0.0
    %1238 = vmatpush.xpose.msra.mxu0 0.0
    %1239 = vmatpush.xpose.msra.mxu0 0.0
    %1240 = vmatpush.xpose.msra.mxu0 0.0
    %1241 = vmatpush.xpose.msra.mxu0 0.0
    %1242 = vmatpush.xpose.msra.mxu0 0.0
    %1243 = vmatpush.xpose.msra.mxu0 0.0
    %1244 = vmatpush.xpose.msra.mxu0 0.0
    %1245 = vmatpush.xpose.msra.mxu0 0.0
    %1246 = vmatpush.xpose.msra.mxu0 0.0
    %1247 = vmatpush.xpose.msra.mxu0 0.0
    %1248 = vmatpush.xpose.msra.mxu0 0.0
    %1249 = vmatpush.xpose.msra.mxu0 0.0
    %1250 = vmatpush.xpose.msra.mxu0 0.0
    %1251 = vmatpush.xpose.msra.mxu0 %v1234
    %1252 = vmatmul.f32.gmra.mxu0 %v1231
    %v1253 = vpop.f32.mrf.mxu0
    %v1254 = vadd.f32 0.0, %v1253
    %1255 = vdwg.mxu0
    %v1257 = vsel %vm405, %v1225, 0
    %v1260 = vsel %vm405, %v1185, 0
    %1262 = vmatpush.xpose.msra.mxu0 0.0
    %1263 = vmatpush.xpose.msra.mxu0 0.0
    %1264 = vmatpush.xpose.msra.mxu0 0.0
    %1265 = vmatpush.xpose.msra.mxu0 0.0
    %1266 = vmatpush.xpose.msra.mxu0 0.0
    %1267 = vmatpush.xpose.msra.mxu0 0.0
    %1268 = vmatpush.xpose.msra.mxu0 0.0
    %1269 = vmatpush.xpose.msra.mxu0 0.0
    %1270 = vmatpush.xpose.msra.mxu0 0.0
    %1271 = vmatpush.xpose.msra.mxu0 0.0
    %1272 = vmatpush.xpose.msra.mxu0 0.0
    %1273 = vmatpush.xpose.msra.mxu0 0.0
    %1274 = vmatpush.xpose.msra.mxu0 0.0
    %1275 = vmatpush.xpose.msra.mxu0 0.0
    %1276 = vmatpush.xpose.msra.mxu0 0.0
    %1277 = vmatpush.xpose.msra.mxu0 %v1260
    %1278 = vmatmul.f32.gmra.mxu0 %v1257
    %v1279 = vpop.f32.mrf.mxu0
    %v1280 = vadd.f32 0.0, %v1279
    %1281 = vdwg.mxu0
    %v1282 = vsel %vm405, %v1254, -inf
    %1283 = vmax.xlane.f32.xlu0 %v1282
    %v1284 = vpop.xlane.xlu0 %1283
    %v1285 = vsel %vm405, %v1280, -inf
    %1286 = vmax.xlane.f32.xlu0 %v1285
    %v1287 = vpop.xlane.xlu0 %1286
    %v1288 = vsub.f32 %v1254, %v1284
    %v1289 = vsub.f32 %v1280, %v1287
    %v1290 = vmul.f32 %v1288, 1.442695
    %v1291 = vpow.pop %v1290
    %v1292 = vmul.f32 %v1289, 1.442695
    %v1293 = vpow.pop %v1292
    %v1294 = vsel %vm405, %v1291, 0.0
    %1295 = vadd.xlane.f32.xlu0 %v1294
    %v1296 = vpop.xlane.xlu0 %1295
    %v1297 = vsel %vm405, %v1293, 0.0
    %1298 = vadd.xlane.f32.xlu0 %v1297
    %v1299 = vpop.xlane.xlu0 %1298
    %v1300 = vrcp.pop %v1296
    %v1301 = vrcp.pop %v1299
    %v1302 = vmul.f32 %v1291, %v1300
    %v1303 = vmul.f32 %v1293, %v1301
    %v1305 = vsel %vm405, %v1302, 0
    %1307 = vmatpush.msra.mxu0 0.0
    %1308 = vmatpush.msra.mxu0 0.0
    %1309 = vmatpush.msra.mxu0 0.0
    %1310 = vmatpush.msra.mxu0 0.0
    %1311 = vmatpush.msra.mxu0 0.0
    %1312 = vmatpush.msra.mxu0 0.0
    %1313 = vmatpush.msra.mxu0 0.0
    %1314 = vmatpush.msra.mxu0 0.0
    %1315 = vmatpush.msra.mxu0 0.0
    %1316 = vmatpush.msra.mxu0 0.0
    %1317 = vmatpush.msra.mxu0 0.0
    %1318 = vmatpush.msra.mxu0 0.0
    %1319 = vmatpush.msra.mxu0 0.0
    %1320 = vmatpush.msra.mxu0 0.0
    %1321 = vmatpush.msra.mxu0 0.0
    %1322 = vmatpush.msra.mxu0 %v1219
    %1323 = vmatmul.f32.gmra.mxu0 %v1305
    %v1324 = vpop.f32.mrf.mxu0
    %v1325 = vadd.f32 0.0, %v1324
    %1326 = vdwg.mxu0
    %v1328 = vsel %vm405, %v1303, 0
    %1330 = vmatpush.msra.mxu0 0.0
    %1331 = vmatpush.msra.mxu0 0.0
    %1332 = vmatpush.msra.mxu0 0.0
    %1333 = vmatpush.msra.mxu0 0.0
    %1334 = vmatpush.msra.mxu0 0.0
    %1335 = vmatpush.msra.mxu0 0.0
    %1336 = vmatpush.msra.mxu0 0.0
    %1337 = vmatpush.msra.mxu0 0.0
    %1338 = vmatpush.msra.mxu0 0.0
    %1339 = vmatpush.msra.mxu0 0.0
    %1340 = vmatpush.msra.mxu0 0.0
    %1341 = vmatpush.msra.mxu0 0.0
    %1342 = vmatpush.msra.mxu0 0.0
    %1343 = vmatpush.msra.mxu0 0.0
    %1344 = vmatpush.msra.mxu0 0.0
    %1345 = vmatpush.msra.mxu0 %v1222
    %1346 = vmatmul.f32.gmra.mxu0 %v1328
    %v1347 = vpop.f32.mrf.mxu0
    %v1348 = vadd.f32 0.0, %v1347
    %1349 = vdwg.mxu0
    %1350 = vrot.lane.b32.xlu0 %v1224, 120
    %v1351 = vpop.permute.xlu0 %1350
    %1352 = vrot.lane.b32.xlu0 %v1182, 120
    %v1353 = vpop.permute.xlu0 %1352
    %v1354 = vsel %vm405, %v1351, 0
    %v1356 = vsel %vm405, %v1353, 0
    %1358 = vmatpush.xpose.msra.mxu0 0.0
    %1359 = vmatpush.xpose.msra.mxu0 0.0
    %1360 = vmatpush.xpose.msra.mxu0 0.0
    %1361 = vmatpush.xpose.msra.mxu0 0.0
    %1362 = vmatpush.xpose.msra.mxu0 0.0
    %1363 = vmatpush.xpose.msra.mxu0 0.0
    %1364 = vmatpush.xpose.msra.mxu0 0.0
    %1365 = vmatpush.xpose.msra.mxu0 0.0
    %1366 = vmatpush.xpose.msra.mxu0 0.0
    %1367 = vmatpush.xpose.msra.mxu0 0.0
    %1368 = vmatpush.xpose.msra.mxu0 0.0
    %1369 = vmatpush.xpose.msra.mxu0 0.0
    %1370 = vmatpush.xpose.msra.mxu0 0.0
    %1371 = vmatpush.xpose.msra.mxu0 0.0
    %1372 = vmatpush.xpose.msra.mxu0 0.0
    %1373 = vmatpush.xpose.msra.mxu0 %v1356
    %1374 = vmatmul.f32.gmra.mxu0 %v1354
    %v1375 = vpop.f32.mrf.mxu0
    %v1376 = vadd.f32 0.0, %v1375
    %1377 = vdwg.mxu0
    %1378 = vrot.lane.b32.xlu0 %v1225, 120
    %v1379 = vpop.permute.xlu0 %1378
    %1380 = vrot.lane.b32.xlu0 %v1185, 120
    %v1381 = vpop.permute.xlu0 %1380
    %v1382 = vsel %vm405, %v1379, 0
    %v1384 = vsel %vm405, %v1381, 0
    %1386 = vmatpush.xpose.msra.mxu0 0.0
    %1387 = vmatpush.xpose.msra.mxu0 0.0
    %1388 = vmatpush.xpose.msra.mxu0 0.0
    %1389 = vmatpush.xpose.msra.mxu0 0.0
    %1390 = vmatpush.xpose.msra.mxu0 0.0
    %1391 = vmatpush.xpose.msra.mxu0 0.0
    %1392 = vmatpush.xpose.msra.mxu0 0.0
    %1393 = vmatpush.xpose.msra.mxu0 0.0
    %1394 = vmatpush.xpose.msra.mxu0 0.0
    %1395 = vmatpush.xpose.msra.mxu0 0.0
    %1396 = vmatpush.xpose.msra.mxu0 0.0
    %1397 = vmatpush.xpose.msra.mxu0 0.0
    %1398 = vmatpush.xpose.msra.mxu0 0.0
    %1399 = vmatpush.xpose.msra.mxu0 0.0
    %1400 = vmatpush.xpose.msra.mxu0 0.0
    %1401 = vmatpush.xpose.msra.mxu0 %v1384
    %1402 = vmatmul.f32.gmra.mxu0 %v1382
    %v1403 = vpop.f32.mrf.mxu0
    %v1404 = vadd.f32 0.0, %v1403
    %1405 = vdwg.mxu0
    %v1406 = vsel %vm405, %v1376, -inf
    %1407 = vmax.xlane.f32.xlu0 %v1406
    %v1408 = vpop.xlane.xlu0 %1407
    %v1409 = vsel %vm405, %v1404, -inf
    %1410 = vmax.xlane.f32.xlu0 %v1409
    %v1411 = vpop.xlane.xlu0 %1410
    %v1412 = vsub.f32 %v1376, %v1408
    %v1413 = vsub.f32 %v1404, %v1411
    %v1414 = vmul.f32 %v1412, 1.442695
    %v1415 = vpow.pop %v1414
    %v1416 = vmul.f32 %v1413, 1.442695
    %v1417 = vpow.pop %v1416
    %v1418 = vsel %vm405, %v1415, 0.0
    %1419 = vadd.xlane.f32.xlu0 %v1418
    %v1420 = vpop.xlane.xlu0 %1419
    %v1421 = vsel %vm405, %v1417, 0.0
    %1422 = vadd.xlane.f32.xlu0 %v1421
    %v1423 = vpop.xlane.xlu0 %1422
    %v1424 = vrcp.pop %v1420
    %v1425 = vrcp.pop %v1423
    %v1426 = vmul.f32 %v1415, %v1424
    %v1427 = vmul.f32 %v1417, %v1425
    %1429 = vrot.lane.b32.xlu0 %v1219, 120
    %v1430 = vpop.permute.xlu0 %1429
    %v1433 = vsel %vm405, %v1426, 0
    %1435 = vmatpush.msra.mxu0 0.0
    %1436 = vmatpush.msra.mxu0 0.0
    %1437 = vmatpush.msra.mxu0 0.0
    %1438 = vmatpush.msra.mxu0 0.0
    %1439 = vmatpush.msra.mxu0 0.0
    %1440 = vmatpush.msra.mxu0 0.0
    %1441 = vmatpush.msra.mxu0 0.0
    %1442 = vmatpush.msra.mxu0 0.0
    %1443 = vmatpush.msra.mxu0 0.0
    %1444 = vmatpush.msra.mxu0 0.0
    %1445 = vmatpush.msra.mxu0 0.0
    %1446 = vmatpush.msra.mxu0 0.0
    %1447 = vmatpush.msra.mxu0 0.0
    %1448 = vmatpush.msra.mxu0 0.0
    %1449 = vmatpush.msra.mxu0 0.0
    %1450 = vmatpush.msra.mxu0 %v1430
    %1451 = vmatmul.f32.gmra.mxu0 %v1433
    %v1452 = vpop.f32.mrf.mxu0
    %v1453 = vadd.f32 0.0, %v1452
    %1454 = vdwg.mxu0
    %1456 = vrot.lane.b32.xlu0 %v1222, 120
    %v1457 = vpop.permute.xlu0 %1456
    %v1460 = vsel %vm405, %v1427, 0
    %1462 = vmatpush.msra.mxu0 0.0
    %1463 = vmatpush.msra.mxu0 0.0
    %1464 = vmatpush.msra.mxu0 0.0
    %1465 = vmatpush.msra.mxu0 0.0
    %1466 = vmatpush.msra.mxu0 0.0
    %1467 = vmatpush.msra.mxu0 0.0
    %1468 = vmatpush.msra.mxu0 0.0
    %1469 = vmatpush.msra.mxu0 0.0
    %1470 = vmatpush.msra.mxu0 0.0
    %1471 = vmatpush.msra.mxu0 0.0
    %1472 = vmatpush.msra.mxu0 0.0
    %1473 = vmatpush.msra.mxu0 0.0
    %1474 = vmatpush.msra.mxu0 0.0
    %1475 = vmatpush.msra.mxu0 0.0
    %1476 = vmatpush.msra.mxu0 0.0
    %1477 = vmatpush.msra.mxu0 %v1457
    %1478 = vmatmul.f32.gmra.mxu0 %v1460
    %v1479 = vpop.f32.mrf.mxu0
    %v1480 = vadd.f32 0.0, %v1479
    %1481 = vdwg.mxu0
    %v1483 = vsel %vm405, %v1453, 0
    %v1486 = vsel %vm405, %v1480, 0
    %1488 = vmatpush.msra.mxu0 0.0
    %1489 = vmatpush.msra.mxu0 0.0
    %1490 = vmatpush.msra.mxu0 0.0
    %1491 = vmatpush.msra.mxu0 0.0
    %1492 = vmatpush.msra.mxu0 0.0
    %1493 = vmatpush.msra.mxu0 0.0
    %1494 = vmatpush.msra.mxu0 0.0
    %1495 = vmatpush.msra.mxu0 0.0
    %1496 = vmatpush.msra.mxu0 0.0
    %1497 = vmatpush.msra.mxu0 0.0
    %1498 = vmatpush.msra.mxu0 0.0
    %1499 = vmatpush.msra.mxu0 0.0
    %1500 = vmatpush.msra.mxu0 0.0
    %1501 = vmatpush.msra.mxu0 0.0
    %1502 = vmatpush.msra.mxu0 0.0
    %1503 = vmatpush.msra.mxu0 %v1227
    %1504 = vmatmul.f32.gmra.mxu0 %v1483
    %v1505 = vpop.f32.mrf.mxu0
    %v1506 = vadd.f32 0.0, %v1505
    %1507 = vmatmul.f32.gmra.mxu0 %v1486
    %v1508 = vpop.f32.mrf.mxu0
    %v1509 = vadd.f32 0.0, %v1508
    %1510 = vdwg.mxu0
    %v1512 = vsel %vm405, %v1325, 0
    %v1515 = vsel %vm405, %v1348, 0
    %1517 = vmatpush.msra.mxu0 0.0
    %1518 = vmatpush.msra.mxu0 0.0
    %1519 = vmatpush.msra.mxu0 0.0
    %1520 = vmatpush.msra.mxu0 0.0
    %1521 = vmatpush.msra.mxu0 0.0
    %1522 = vmatpush.msra.mxu0 0.0
    %1523 = vmatpush.msra.mxu0 0.0
    %1524 = vmatpush.msra.mxu0 0.0
    %1525 = vmatpush.msra.mxu0 0.0
    %1526 = vmatpush.msra.mxu0 0.0
    %1527 = vmatpush.msra.mxu0 0.0
    %1528 = vmatpush.msra.mxu0 0.0
    %1529 = vmatpush.msra.mxu0 0.0
    %1530 = vmatpush.msra.mxu0 0.0
    %1531 = vmatpush.msra.mxu0 0.0
    %1532 = vmatpush.msra.mxu0 %v1226
    %1533 = vmatmul.f32.gmra.mxu0 %v1512
    %v1534 = vpop.f32.mrf.mxu0
    %v1535 = vadd.f32 %v1506, %v1534
    %1536 = vmatmul.f32.gmra.mxu0 %v1515
    %v1537 = vpop.f32.mrf.mxu0
    %v1538 = vadd.f32 %v1509, %v1537
    %1539 = vdwg.mxu0
    %1540 = vrot.lane.b32.xlu0 %v1224, 112
    %v1541 = vpop.permute.xlu0 %1540
    %1542 = vrot.lane.b32.xlu0 %v1182, 112
    %v1543 = vpop.permute.xlu0 %1542
    %v1544 = vsel %vm405, %v1541, 0
    %v1546 = vsel %vm405, %v1543, 0
    %1548 = vmatpush.xpose.msra.mxu0 0.0
    %1549 = vmatpush.xpose.msra.mxu0 0.0
    %1550 = vmatpush.xpose.msra.mxu0 0.0
    %1551 = vmatpush.xpose.msra.mxu0 0.0
    %1552 = vmatpush.xpose.msra.mxu0 0.0
    %1553 = vmatpush.xpose.msra.mxu0 0.0
    %1554 = vmatpush.xpose.msra.mxu0 0.0
    %1555 = vmatpush.xpose.msra.mxu0 0.0
    %1556 = vmatpush.xpose.msra.mxu0 0.0
    %1557 = vmatpush.xpose.msra.mxu0 0.0
    %1558 = vmatpush.xpose.msra.mxu0 0.0
    %1559 = vmatpush.xpose.msra.mxu0 0.0
    %1560 = vmatpush.xpose.msra.mxu0 0.0
    %1561 = vmatpush.xpose.msra.mxu0 0.0
    %1562 = vmatpush.xpose.msra.mxu0 0.0
    %1563 = vmatpush.xpose.msra.mxu0 %v1546
    %1564 = vmatmul.f32.gmra.mxu0 %v1544
    %v1565 = vpop.f32.mrf.mxu0
    %v1566 = vadd.f32 0.0, %v1565
    %1567 = vdwg.mxu0
    %1568 = vrot.lane.b32.xlu0 %v1225, 112
    %v1569 = vpop.permute.xlu0 %1568
    %1570 = vrot.lane.b32.xlu0 %v1185, 112
    %v1571 = vpop.permute.xlu0 %1570
    %v1572 = vsel %vm405, %v1569, 0
    %v1574 = vsel %vm405, %v1571, 0
    %1576 = vmatpush.xpose.msra.mxu0 0.0
    %1577 = vmatpush.xpose.msra.mxu0 0.0
    %1578 = vmatpush.xpose.msra.mxu0 0.0
    %1579 = vmatpush.xpose.msra.mxu0 0.0
    %1580 = vmatpush.xpose.msra.mxu0 0.0
    %1581 = vmatpush.xpose.msra.mxu0 0.0
    %1582 = vmatpush.xpose.msra.mxu0 0.0
    %1583 = vmatpush.xpose.msra.mxu0 0.0
    %1584 = vmatpush.xpose.msra.mxu0 0.0
    %1585 = vmatpush.xpose.msra.mxu0 0.0
    %1586 = vmatpush.xpose.msra.mxu0 0.0
    %1587 = vmatpush.xpose.msra.mxu0 0.0
    %1588 = vmatpush.xpose.msra.mxu0 0.0
    %1589 = vmatpush.xpose.msra.mxu0 0.0
    %1590 = vmatpush.xpose.msra.mxu0 0.0
    %1591 = vmatpush.xpose.msra.mxu0 %v1574
    %1592 = vmatmul.f32.gmra.mxu0 %v1572
    %v1593 = vpop.f32.mrf.mxu0
    %v1594 = vadd.f32 0.0, %v1593
    %1595 = vdwg.mxu0
    %v1596 = vsel %vm405, %v1566, -inf
    %1597 = vmax.xlane.f32.xlu0 %v1596
    %v1598 = vpop.xlane.xlu0 %1597
    %v1599 = vsel %vm405, %v1594, -inf
    %1600 = vmax.xlane.f32.xlu0 %v1599
    %v1601 = vpop.xlane.xlu0 %1600
    %v1602 = vsub.f32 %v1566, %v1598
    %v1603 = vsub.f32 %v1594, %v1601
    %v1604 = vmul.f32 %v1602, 1.442695
    %v1605 = vpow.pop %v1604
    %v1606 = vmul.f32 %v1603, 1.442695
    %v1607 = vpow.pop %v1606
    %v1608 = vsel %vm405, %v1605, 0.0
    %1609 = vadd.xlane.f32.xlu0 %v1608
    %v1610 = vpop.xlane.xlu0 %1609
    %v1611 = vsel %vm405, %v1607, 0.0
    %1612 = vadd.xlane.f32.xlu0 %v1611
    %v1613 = vpop.xlane.xlu0 %1612
    %v1614 = vrcp.pop %v1610
    %v1615 = vrcp.pop %v1613
    %v1616 = vmul.f32 %v1605, %v1614
    %v1617 = vmul.f32 %v1607, %v1615
    %1618 = vrot.lane.b32.xlu0 %v1219, 112
    %v1619 = vpop.permute.xlu0 %1618
    %v1622 = vsel %vm405, %v1616, 0
    %1624 = vmatpush.msra.mxu0 0.0
    %1625 = vmatpush.msra.mxu0 0.0
    %1626 = vmatpush.msra.mxu0 0.0
    %1627 = vmatpush.msra.mxu0 0.0
    %1628 = vmatpush.msra.mxu0 0.0
    %1629 = vmatpush.msra.mxu0 0.0
    %1630 = vmatpush.msra.mxu0 0.0
    %1631 = vmatpush.msra.mxu0 0.0
    %1632 = vmatpush.msra.mxu0 0.0
    %1633 = vmatpush.msra.mxu0 0.0
    %1634 = vmatpush.msra.mxu0 0.0
    %1635 = vmatpush.msra.mxu0 0.0
    %1636 = vmatpush.msra.mxu0 0.0
    %1637 = vmatpush.msra.mxu0 0.0
    %1638 = vmatpush.msra.mxu0 0.0
    %1639 = vmatpush.msra.mxu0 %v1619
    %1640 = vmatmul.f32.gmra.mxu0 %v1622
    %v1641 = vpop.f32.mrf.mxu0
    %v1642 = vadd.f32 0.0, %v1641
    %1643 = vdwg.mxu0
    %1644 = vrot.lane.b32.xlu0 %v1222, 112
    %v1645 = vpop.permute.xlu0 %1644
    %v1648 = vsel %vm405, %v1617, 0
    %1650 = vmatpush.msra.mxu0 0.0
    %1651 = vmatpush.msra.mxu0 0.0
    %1652 = vmatpush.msra.mxu0 0.0
    %1653 = vmatpush.msra.mxu0 0.0
    %1654 = vmatpush.msra.mxu0 0.0
    %1655 = vmatpush.msra.mxu0 0.0
    %1656 = vmatpush.msra.mxu0 0.0
    %1657 = vmatpush.msra.mxu0 0.0
    %1658 = vmatpush.msra.mxu0 0.0
    %1659 = vmatpush.msra.mxu0 0.0
    %1660 = vmatpush.msra.mxu0 0.0
    %1661 = vmatpush.msra.mxu0 0.0
    %1662 = vmatpush.msra.mxu0 0.0
    %1663 = vmatpush.msra.mxu0 0.0
    %1664 = vmatpush.msra.mxu0 0.0
    %1665 = vmatpush.msra.mxu0 %v1645
    %1666 = vmatmul.f32.gmra.mxu0 %v1648
    %v1667 = vpop.f32.mrf.mxu0
    %v1668 = vadd.f32 0.0, %v1667
    %1669 = vdwg.mxu0
    %v1671 = vsel %vm405, %v1642, 0
    %v1674 = vsel %vm405, %v1668, 0
    %1676 = vmatpush.msra.mxu0 0.0
    %1677 = vmatpush.msra.mxu0 0.0
    %1678 = vmatpush.msra.mxu0 0.0
    %1679 = vmatpush.msra.mxu0 0.0
    %1680 = vmatpush.msra.mxu0 0.0
    %1681 = vmatpush.msra.mxu0 0.0
    %1682 = vmatpush.msra.mxu0 0.0
    %1683 = vmatpush.msra.mxu0 0.0
    %1684 = vmatpush.msra.mxu0 0.0
    %1685 = vmatpush.msra.mxu0 0.0
    %1686 = vmatpush.msra.mxu0 0.0
    %1687 = vmatpush.msra.mxu0 0.0
    %1688 = vmatpush.msra.mxu0 0.0
    %1689 = vmatpush.msra.mxu0 0.0
    %1690 = vmatpush.msra.mxu0 0.0
    %1691 = vmatpush.msra.mxu0 %v1228
    %1692 = vmatmul.f32.gmra.mxu0 %v1671
    %v1693 = vpop.f32.mrf.mxu0
    %v1694 = vadd.f32 0.0, %v1693
    %1695 = vmatmul.f32.gmra.mxu0 %v1674
    %v1696 = vpop.f32.mrf.mxu0
    %v1697 = vadd.f32 0.0, %v1696
    %1698 = vdwg.mxu0
    %v1699 = vadd.f32 %v1535, %v1694
    %v1700 = vadd.f32 %v1538, %v1697
    %1701 = vrot.lane.b32.xlu0 %v1224, 104
    %v1702 = vpop.permute.xlu0 %1701
    %1703 = vrot.lane.b32.xlu0 %v1182, 104
    %v1704 = vpop.permute.xlu0 %1703
    %v1705 = vsel %vm405, %v1702, 0
    %v1707 = vsel %vm405, %v1704, 0
    %1709 = vmatpush.xpose.msra.mxu0 0.0
    %1710 = vmatpush.xpose.msra.mxu0 0.0
    %1711 = vmatpush.xpose.msra.mxu0 0.0
    %1712 = vmatpush.xpose.msra.mxu0 0.0
    %1713 = vmatpush.xpose.msra.mxu0 0.0
    %1714 = vmatpush.xpose.msra.mxu0 0.0
    %1715 = vmatpush.xpose.msra.mxu0 0.0
    %1716 = vmatpush.xpose.msra.mxu0 0.0
    %1717 = vmatpush.xpose.msra.mxu0 0.0
    %1718 = vmatpush.xpose.msra.mxu0 0.0
    %1719 = vmatpush.xpose.msra.mxu0 0.0
    %1720 = vmatpush.xpose.msra.mxu0 0.0
    %1721 = vmatpush.xpose.msra.mxu0 0.0
    %1722 = vmatpush.xpose.msra.mxu0 0.0
    %1723 = vmatpush.xpose.msra.mxu0 0.0
    %1724 = vmatpush.xpose.msra.mxu0 %v1707
    %1725 = vmatmul.f32.gmra.mxu0 %v1705
    %v1726 = vpop.f32.mrf.mxu0
    %v1727 = vadd.f32 0.0, %v1726
    %1728 = vdwg.mxu0
    %1729 = vrot.lane.b32.xlu0 %v1225, 104
    %v1730 = vpop.permute.xlu0 %1729
    %1731 = vrot.lane.b32.xlu0 %v1185, 104
    %v1732 = vpop.permute.xlu0 %1731
    %v1733 = vsel %vm405, %v1730, 0
    %v1735 = vsel %vm405, %v1732, 0
    %1737 = vmatpush.xpose.msra.mxu0 0.0
    %1738 = vmatpush.xpose.msra.mxu0 0.0
    %1739 = vmatpush.xpose.msra.mxu0 0.0
    %1740 = vmatpush.xpose.msra.mxu0 0.0
    %1741 = vmatpush.xpose.msra.mxu0 0.0
    %1742 = vmatpush.xpose.msra.mxu0 0.0
    %1743 = vmatpush.xpose.msra.mxu0 0.0
    %1744 = vmatpush.xpose.msra.mxu0 0.0
    %1745 = vmatpush.xpose.msra.mxu0 0.0
    %1746 = vmatpush.xpose.msra.mxu0 0.0
    %1747 = vmatpush.xpose.msra.mxu0 0.0
    %1748 = vmatpush.xpose.msra.mxu0 0.0
    %1749 = vmatpush.xpose.msra.mxu0 0.0
    %1750 = vmatpush.xpose.msra.mxu0 0.0
    %1751 = vmatpush.xpose.msra.mxu0 0.0
    %1752 = vmatpush.xpose.msra.mxu0 %v1735
    %1753 = vmatmul.f32.gmra.mxu0 %v1733
    %v1754 = vpop.f32.mrf.mxu0
    %v1755 = vadd.f32 0.0, %v1754
    %1756 = vdwg.mxu0
    %v1757 = vsel %vm405, %v1727, -inf
    %1758 = vmax.xlane.f32.xlu0 %v1757
    %v1759 = vpop.xlane.xlu0 %1758
    %v1760 = vsel %vm405, %v1755, -inf
    %1761 = vmax.xlane.f32.xlu0 %v1760
    %v1762 = vpop.xlane.xlu0 %1761
    %v1763 = vsub.f32 %v1727, %v1759
    %v1764 = vsub.f32 %v1755, %v1762
    %v1765 = vmul.f32 %v1763, 1.442695
    %v1766 = vpow.pop %v1765
    %v1767 = vmul.f32 %v1764, 1.442695
    %v1768 = vpow.pop %v1767
    %v1769 = vsel %vm405, %v1766, 0.0
    %1770 = vadd.xlane.f32.xlu0 %v1769
    %v1771 = vpop.xlane.xlu0 %1770
    %v1772 = vsel %vm405, %v1768, 0.0
    %1773 = vadd.xlane.f32.xlu0 %v1772
    %v1774 = vpop.xlane.xlu0 %1773
    %v1775 = vrcp.pop %v1771
    %v1776 = vrcp.pop %v1774
    %v1777 = vmul.f32 %v1766, %v1775
    %v1778 = vmul.f32 %v1768, %v1776
    %1779 = vrot.lane.b32.xlu0 %v1219, 104
    %v1780 = vpop.permute.xlu0 %1779
    %v1783 = vsel %vm405, %v1777, 0
    %1785 = vmatpush.msra.mxu0 0.0
    %1786 = vmatpush.msra.mxu0 0.0
    %1787 = vmatpush.msra.mxu0 0.0
    %1788 = vmatpush.msra.mxu0 0.0
    %1789 = vmatpush.msra.mxu0 0.0
    %1790 = vmatpush.msra.mxu0 0.0
    %1791 = vmatpush.msra.mxu0 0.0
    %1792 = vmatpush.msra.mxu0 0.0
    %1793 = vmatpush.msra.mxu0 0.0
    %1794 = vmatpush.msra.mxu0 0.0
    %1795 = vmatpush.msra.mxu0 0.0
    %1796 = vmatpush.msra.mxu0 0.0
    %1797 = vmatpush.msra.mxu0 0.0
    %1798 = vmatpush.msra.mxu0 0.0
    %1799 = vmatpush.msra.mxu0 0.0
    %1800 = vmatpush.msra.mxu0 %v1780
    %1801 = vmatmul.f32.gmra.mxu0 %v1783
    %v1802 = vpop.f32.mrf.mxu0
    %v1803 = vadd.f32 0.0, %v1802
    %1804 = vdwg.mxu0
    %1805 = vrot.lane.b32.xlu0 %v1222, 104
    %v1806 = vpop.permute.xlu0 %1805
    %v1809 = vsel %vm405, %v1778, 0
    %1811 = vmatpush.msra.mxu0 0.0
    %1812 = vmatpush.msra.mxu0 0.0
    %1813 = vmatpush.msra.mxu0 0.0
    %1814 = vmatpush.msra.mxu0 0.0
    %1815 = vmatpush.msra.mxu0 0.0
    %1816 = vmatpush.msra.mxu0 0.0
    %1817 = vmatpush.msra.mxu0 0.0
    %1818 = vmatpush.msra.mxu0 0.0
    %1819 = vmatpush.msra.mxu0 0.0
    %1820 = vmatpush.msra.mxu0 0.0
    %1821 = vmatpush.msra.mxu0 0.0
    %1822 = vmatpush.msra.mxu0 0.0
    %1823 = vmatpush.msra.mxu0 0.0
    %1824 = vmatpush.msra.mxu0 0.0
    %1825 = vmatpush.msra.mxu0 0.0
    %1826 = vmatpush.msra.mxu0 %v1806
    %1827 = vmatmul.f32.gmra.mxu0 %v1809
    %v1828 = vpop.f32.mrf.mxu0
    %v1829 = vadd.f32 0.0, %v1828
    %1830 = vdwg.mxu0
    %v1832 = vsel %vm405, %v1803, 0
    %v1835 = vsel %vm405, %v1829, 0
    %1837 = vmatpush.msra.mxu0 0.0
    %1838 = vmatpush.msra.mxu0 0.0
    %1839 = vmatpush.msra.mxu0 0.0
    %1840 = vmatpush.msra.mxu0 0.0
    %1841 = vmatpush.msra.mxu0 0.0
    %1842 = vmatpush.msra.mxu0 0.0
    %1843 = vmatpush.msra.mxu0 0.0
    %1844 = vmatpush.msra.mxu0 0.0
    %1845 = vmatpush.msra.mxu0 0.0
    %1846 = vmatpush.msra.mxu0 0.0
    %1847 = vmatpush.msra.mxu0 0.0
    %1848 = vmatpush.msra.mxu0 0.0
    %1849 = vmatpush.msra.mxu0 0.0
    %1850 = vmatpush.msra.mxu0 0.0
    %1851 = vmatpush.msra.mxu0 0.0
    %1852 = vmatpush.msra.mxu0 %v1229
    %1853 = vmatmul.f32.gmra.mxu0 %v1832
    %v1854 = vpop.f32.mrf.mxu0
    %v1855 = vadd.f32 0.0, %v1854
    %1856 = vmatmul.f32.gmra.mxu0 %v1835
    %v1857 = vpop.f32.mrf.mxu0
    %v1858 = vadd.f32 0.0, %v1857
    %1859 = vdwg.mxu0
    %v1860 = vadd.f32 %v1699, %v1855
    %v1861 = vadd.f32 %v1700, %v1858
    %v1862 = vld [vmem:[%s43] sm:$0x1]
    %v1864 = vperm.slane %v1862, 0
    %v1866 = vadd.f32 %v1860, %v1864
    %v1867 = vadd.f32 %v1861, %v1864
    %v1868 = vadd.f32 %v1107, %v1866
    %v1869 = vadd.f32 %v1108, %v1867
    %v1870 = vsel %vm301, %v1868, 0.0
    %1871 = vadd.xlane.f32.xlu0 %v1870
    %v1872 = vpop.xlane.xlu0 %1871
    %v1873 = vsel %vm301, %v1869, 0.0
    %1874 = vadd.xlane.f32.xlu0 %v1873
    %v1875 = vpop.xlane.xlu0 %1874
    %v1876 = vmul.f32 %v1872, %v1058
    %v1877 = vmul.f32 %v1875, %v1058
    %v1878 = vsub.f32 %v1868, %v1876
    %v1879 = vsub.f32 %v1869, %v1877
    %v1880 = vmul.f32 %v1878, %v1878
    %v1881 = vmul.f32 %v1879, %v1879
    %v1882 = vsel %vm301, %v1880, 0.0
    %1883 = vadd.xlane.f32.xlu0 %v1882
    %v1884 = vpop.xlane.xlu0 %1883
    %v1885 = vsel %vm301, %v1881, 0.0
    %1886 = vadd.xlane.f32.xlu0 %v1885
    %v1887 = vpop.xlane.xlu0 %1886
    %v1888 = vmul.f32 %v1884, %v1058
    %v1889 = vmul.f32 %v1887, %v1058
    %v1890 = vadd.f32 %v1888, 1e-05
    %v1891 = vadd.f32 %v1889, 1e-05
    %v1892 = vrsqrt.pop %v1890
    %v1893 = vmul.f32 %v1892, %v1890
    %v1894 = vmul.f32 %v1893, %v1892
    %v1895 = vmul.f32 0.5, %v1894
    %v1896 = vsub.f32 1.5, %v1895
    %v1897 = vmul.f32 %v1892, %v1896
    %vm1898 = vweird.f32 %v1890
    %vm1899 = vweird.f32 %v1892
    %vm1900 = vmor %vm1898, %vm1899
    %v1901 = vsel %vm1900, %v1892, %v1897
    %v1902 = vrsqrt.pop %v1891
    %v1903 = vmul.f32 %v1902, %v1891
    %v1904 = vmul.f32 %v1903, %v1902
    %v1905 = vmul.f32 0.5, %v1904
    %v1906 = vsub.f32 1.5, %v1905
    %v1907 = vmul.f32 %v1902, %v1906
    %vm1908 = vweird.f32 %v1891
    %vm1909 = vweird.f32 %v1902
    %vm1910 = vmor %vm1908, %vm1909
    %v1911 = vsel %vm1910, %v1902, %v1907
    %v1912 = vmul.f32 %v1878, %v1901
    %v1913 = vmul.f32 %v1879, %v1911
    %v1914 = vld [vmem:[%s45] sm:$0x1]
    %v1916 = vperm.slane %v1914, 0
    %v1918 = vmul.f32 %v1912, %v1916
    %v1919 = vmul.f32 %v1913, %v1916
    %v1920 = vld [vmem:[%s47] sm:$0x1]
    %v1922 = vperm.slane %v1920, 0
    %v1924 = vadd.f32 %v1918, %v1922
    %v1925 = vadd.f32 %v1919, %v1922
    %v1926 = vld [vmem:[#allocation17] sm:$0xff]
    %v1927 = vld [vmem:[#allocation17 + $0x8] sm:$0xff]
    %v1928 = vld [vmem:[#allocation17 + $0x10] sm:$0xff]
    %v1929 = vld [vmem:[#allocation17 + $0x18] sm:$0xff]
    %v1930 = vld [vmem:[%s51] sm:$0x1]
    %v1932 = vperm.slane %v1930, 0
    %v1935 = vsel %vm301, %v1924, 0
    %v1938 = vsel %vm301, %v1925, 0
    %1940 = vmatpush.msra.mxu0 0.0
    %1941 = vmatpush.msra.mxu0 0.0
    %1942 = vmatpush.msra.mxu0 0.0
    %1943 = vmatpush.msra.mxu0 0.0
    %1944 = vmatpush.msra.mxu0 0.0
    %1945 = vmatpush.msra.mxu0 0.0
    %1946 = vmatpush.msra.mxu0 0.0
    %1947 = vmatpush.msra.mxu0 0.0
    %1948 = vmatpush.msra.mxu0 0.0
    %1949 = vmatpush.msra.mxu0 0.0
    %1950 = vmatpush.msra.mxu0 0.0
    %1951 = vmatpush.msra.mxu0 0.0
    %1952 = vmatpush.msra.mxu0 %v1929
    %1953 = vmatpush.msra.mxu0 %v1928
    %1954 = vmatpush.msra.mxu0 %v1927
    %1955 = vmatpush.msra.mxu0 %v1926
    %1956 = vmatmul.f32.gmra.mxu0 %v1935
    %v1957 = vpop.f32.mrf.mxu0
    %v1958 = vadd.f32 %v1932, %v1957
    %1959 = vmatmul.f32.gmra.mxu0 %v1938
    %v1960 = vpop.f32.mrf.mxu0
    %v1961 = vadd.f32 %v1932, %v1960
    %1962 = vdwg.mxu0
    %v1963 = vmax.f32 %v1958, 0.0
    %v1964 = vmax.f32 %v1961, 0.0
    %v1965 = vld [vmem:[%s53] sm:$0xff]
    %v1966 = vld [vmem:[%s53 + $0x8] sm:$0xff]
    %v1967 = vld [vmem:[%s53 + $0x10] sm:$0xff]
    %v1968 = vld [vmem:[%s53 + $0x18] sm:$0xff]
    %v1969 = vld [vmem:[%s53 + $0x20] sm:$0xff]
    %v1970 = vld [vmem:[%s53 + $0x28] sm:$0xff]
    %v1971 = vld [vmem:[%s53 + $0x30] sm:$0xff]
    %v1972 = vld [vmem:[%s53 + $0x38] sm:$0xff]
    %v1973 = vld [vmem:[%s55] sm:$0x1]
    %v1975 = vperm.slane %v1973, 0
    %vm1977 = vcmask 523264
    %v1979 = vsel %vm1977, %v1963, 0
    %v1982 = vsel %vm1977, %v1964, 0
    %1984 = vmatpush.msra.mxu0 0.0
    %1985 = vmatpush.msra.mxu0 0.0
    %1986 = vmatpush.msra.mxu0 0.0
    %1987 = vmatpush.msra.mxu0 0.0
    %1988 = vmatpush.msra.mxu0 0.0
    %1989 = vmatpush.msra.mxu0 0.0
    %1990 = vmatpush.msra.mxu0 0.0
    %1991 = vmatpush.msra.mxu0 0.0
    %1992 = vmatpush.msra.mxu0 %v1972
    %1993 = vmatpush.msra.mxu0 %v1971
    %1994 = vmatpush.msra.mxu0 %v1970
    %1995 = vmatpush.msra.mxu0 %v1969
    %1996 = vmatpush.msra.mxu0 %v1968
    %1997 = vmatpush.msra.mxu0 %v1967
    %1998 = vmatpush.msra.mxu0 %v1966
    %1999 = vmatpush.msra.mxu0 %v1965
    %2000 = vmatmul.f32.gmra.mxu0 %v1979
    %v2001 = vpop.f32.mrf.mxu0
    %v2002 = vadd.f32 %v1975, %v2001
    %2003 = vmatmul.f32.gmra.mxu0 %v1982
    %v2004 = vpop.f32.mrf.mxu0
    %v2005 = vadd.f32 %v1975, %v2004
    %2006 = vdwg.mxu0
    %v2007 = vadd.f32 %v1924, %v2002
    %v2008 = vadd.f32 %v1925, %v2005
    %v2009 = vsel %vm301, %v2007, 0.0
    %2010 = vadd.xlane.f32.xlu0 %v2009
    %v2011 = vpop.xlane.xlu0 %2010
    %v2012 = vsel %vm301, %v2008, 0.0
    %2013 = vadd.xlane.f32.xlu0 %v2012
    %v2014 = vpop.xlane.xlu0 %2013
    %v2015 = vmul.f32 %v2011, %v1058
    %v2016 = vmul.f32 %v2014, %v1058
    %v2017 = vsub.f32 %v2007, %v2015
    %v2018 = vsub.f32 %v2008, %v2016
    %v2019 = vmul.f32 %v2017, %v2017
    %v2020 = vmul.f32 %v2018, %v2018
    %v2021 = vsel %vm301, %v2019, 0.0
    %2022 = vadd.xlane.f32.xlu0 %v2021
    %v2023 = vpop.xlane.xlu0 %2022
    %v2024 = vsel %vm301, %v2020, 0.0
    %2025 = vadd.xlane.f32.xlu0 %v2024
    %v2026 = vpop.xlane.xlu0 %2025
    %v2027 = vmul.f32 %v2023, %v1058
    %v2028 = vmul.f32 %v2026, %v1058
    %v2029 = vadd.f32 %v2027, 1e-05
    %v2030 = vadd.f32 %v2028, 1e-05
    %v2031 = vrsqrt.pop %v2029
    %v2032 = vmul.f32 %v2031, %v2029
    %v2033 = vmul.f32 %v2032, %v2031
    %v2034 = vmul.f32 0.5, %v2033
    %v2035 = vsub.f32 1.5, %v2034
    %v2036 = vmul.f32 %v2031, %v2035
    %vm2037 = vweird.f32 %v2029
    %vm2038 = vweird.f32 %v2031
    %vm2039 = vmor %vm2037, %vm2038
    %v2040 = vsel %vm2039, %v2031, %v2036
    %v2041 = vrsqrt.pop %v2030
    %v2042 = vmul.f32 %v2041, %v2030
    %v2043 = vmul.f32 %v2042, %v2041
    %v2044 = vmul.f32 0.5, %v2043
    %v2045 = vsub.f32 1.5, %v2044
    %v2046 = vmul.f32 %v2041, %v2045
    %vm2047 = vweird.f32 %v2030
    %vm2048 = vweird.f32 %v2041
    %vm2049 = vmor %vm2047, %vm2048
    %v2050 = vsel %vm2049, %v2041, %v2046
    %v2051 = vmul.f32 %v2017, %v2040
    %v2052 = vmul.f32 %v2018, %v2050
    %v2053 = vld [vmem:[%s57] sm:$0x1]
    %v2055 = vperm.slane %v2053, 0
    %v2057 = vmul.f32 %v2051, %v2055
    %v2058 = vmul.f32 %v2052, %v2055
    %v2059 = vld [vmem:[%s59] sm:$0x1]
    %v2061 = vperm.slane %v2059, 0
    %v2063 = vadd.f32 %v2057, %v2061
    %v2064 = vadd.f32 %v2058, %v2061
    %2065 = vst.msk [vmem:[#allocation19] sm:$0xff] %vm301, %v2063
    %2066 = vst.msk [vmem:[#allocation19 + $0x8] sm:$0xff] %vm301, %v2064
    // Predicated region
    $region162: #{tpu_custom_call.1} parent=1 // pred_check
      _
    $region163: #{tpu_custom_call.1} parent=1 // pred_check_branch
      %2068 = sbr.rel (0) target = $region165
    $region164: #{tpu_custom_call.1} parent=1 // pred_region
      %2070 = vsyncadd [#allocation4], 0
      %s2071 = sshll.u32 [#allocation19], 4
      %s2072 = int_to_ptr.vmem [resolvable:$true] %s2071
      %s2073 = sshll.u32 %s61, 4
      %s2074 = int_to_ptr.hbm [resolvable:$true] %s2073
      %2079 = dma.vmem_to_hbm [thread:$0]  %s2072, 256, %s2074, [#allocation4], 128, 128, 8
    $region165: #{tpu_custom_call.1} parent=1 // pred_fallthru
      _
    // Predicated region
    $region166: #{tpu_custom_call.1} parent=1 // pred_check
      _
    $region167: #{tpu_custom_call.1} parent=1 // pred_check_branch
      %2081 = sbr.rel (0) target = $region169
    $region168: #{tpu_custom_call.1} parent=1 // pred_region
      %2083 = dma.done [#allocation4], 256
    $region169: #{tpu_custom_call.1} parent=1 // pred_fallthru
      _
    %2084 = vsyncpa [#allocation3], 1
    %2085 = vsyncpa [#allocation6], 1
    %2086 = vsyncpa [#allocation9], 1
    %2087 = vsyncpa [#allocation12], 1
    %2088 = vsyncpa [#allocation15], 1
    %2089 = vsyncpa [#allocation18], 1
    %2090 = vsyncpa [#allocation4], 1

</llo_original>
